<compile_context>
chip_gen: v6e
topology: v6e:2x2x1
jax: 0.10.0
libtpu: 0.0.40
codegen_flags: <defaults>
</compile_context>

<pallas_src>
import functools

import jax
import jax.numpy as jnp
import numpy as np
from jax.experimental import pallas as pl
from jax.experimental.pallas import tpu as pltpu


def _surname_kernel(x_idx_ref, nat_idx_ref, gi_table_ref, nation_emb_ref,
                    w_hh_ref, b_hn_ref, w_fc_ref, b_fc_ref,
                    y_ref, h_all_scr,
                    *, T, Bp, Hp, Vp, Nk, V, apply_softmax):
    """Single-invocation GRU + FC.

    x_idx_ref    : (T*Bp, 1) int32, VMEM  time-major char indices (-1 = padding row)
    nat_idx_ref  : (Bp, 1)   int32, VMEM  nationality indices (-1 = padding row)
    gi_table_ref : (Vp, 3Hp) f32,   VMEM  char_emb @ W_ih + (b_ih + b_hh[r,z])
    nation_emb   : (Nk, Hp)  f32,   VMEM  nation embedding table (padded)
    w_hh_ref     : (Hp, 3Hp) bf16         gates r,z,n at 128-aligned lane blocks
    b_hn_ref     : (1, Hp)   f32          n-gate part of b_hh
    w_fc_ref     : (Hp, Vp)  bf16
    b_fc_ref     : (1, Vp)   f32
    y_ref        : (T*Bp, Vp) f32         time-major logits / probabilities
    h_all_scr    : (T*Bp, Hp) f32 VMEM    per-step hidden states (FC input)
    """
    f32, bf16 = jnp.float32, jnp.bfloat16

    # ---- Phase 0+1 (fused): one-hot gathers on the MXU.
    # gi_table already contains the input projection + folded biases, so a
    # one-hot row-gather IS the hoisted input projection for all time steps.
    x_idx = x_idx_ref[...]                                          # (T*Bp, 1)
    col_v = jax.lax.broadcasted_iota(jnp.int32, (T * Bp, Vp), 1)
    onehot_x = (x_idx == col_v).astype(f32)                         # exact gather
    gi_all = jnp.dot(onehot_x, gi_table_ref[...],
                     preferred_element_type=f32)                    # (T*Bp, 3Hp)

    nat_idx = nat_idx_ref[...]                                      # (Bp, 1)
    col_n = jax.lax.broadcasted_iota(jnp.int32, (Bp, Nk), 1)
    onehot_n = (nat_idx == col_n).astype(f32)
    h = jnp.dot(onehot_n, nation_emb_ref[...],
                preferred_element_type=f32)                         # (Bp, Hp)

    # ---- Phase 2: serial GRU recurrence -- only h @ W_hh on the critical path.
    # T is small and static, so the loop is fully unrolled at trace time; for
    # long sequences switch to lax.fori_loop to bound code size.
    w_hh = w_hh_ref[...]                                            # bf16, hoisted
    b_hn = jnp.broadcast_to(b_hn_ref[...], (Bp, Hp))                # hoisted broadcast
    for t in range(T):
        gi = gi_all[t * Bp:(t + 1) * Bp, :]                         # static, tile-aligned
        gh = jnp.dot(h.astype(bf16), w_hh, preferred_element_type=f32)
        # fused r/z: one sigmoid over the contiguous 2-gate block
        rz = jax.nn.sigmoid(gi[:, 0:2 * Hp] + gh[:, 0:2 * Hp])
        r = rz[:, 0:Hp]
        z = rz[:, Hp:2 * Hp]
        n = jnp.tanh(gi[:, 2 * Hp:3 * Hp] + r * (gh[:, 2 * Hp:3 * Hp] + b_hn))
        h = n + z * (h - n)                                         # == (1-z)*n + z*h
        h_all_scr[t * Bp:(t + 1) * Bp, :] = h                       # unmasked 8-row store

    # ---- Phase 3: FC over all time steps -- one MXU matmul.
    # TODO(synk): F.dropout(p=0.5) defaults to training=True in the PyTorch
    # functional call; implemented here as identity (eval-mode semantics).
    logits = jnp.dot(h_all_scr[...].astype(bf16), w_fc_ref[...],
                     preferred_element_type=f32) + b_fc_ref[...]

    if apply_softmax:
        col = jax.lax.broadcasted_iota(jnp.int32, logits.shape, 1)
        logits = jnp.where(col < V, logits, -1e30)                  # mask vocab-padding lanes
        m = jnp.max(logits, axis=-1, keepdims=True)
        e = jnp.exp(logits - m)
        s = jnp.sum(e, axis=-1, keepdims=True)
        logits = e * pl.reciprocal(s, approx=False)                 # exact: rows sum to 1

    y_ref[...] = logits                                             # one full-width 128-lane store


def _round_up(x, m):
    return ((x + m - 1) // m) * m


@functools.partial(jax.jit, static_argnames=("apply_softmax",))
def surname_generation_forward(x_in, nationality_index, params, apply_softmax=False):
    """Forward pass matching SurnameGenerationModel.forward.

    x_in:              (B, T) int char indices
    nationality_index: (B,)   int nationality indices
    returns:           (B, T, V) float32 logits (probabilities if apply_softmax)
    """
    char_emb = params["char_emb"]      # (V, E), row padding_idx is zero
    nation_emb = params["nation_emb"]  # (N, H)
    w_ih = params["w_ih"]              # (E, 3H), gate order r, z, n
    w_hh = params["w_hh"]              # (H, 3H)
    b_ih = params["b_ih"]              # (1, 3H)
    b_hh = params["b_hh"]              # (1, 3H)
    w_fc = params["w_fc"]              # (H, V)
    b_fc = params["b_fc"]              # (1, V)

    B, T = x_in.shape
    V, E = char_emb.shape
    N, H = nation_emb.shape

    LANE, SUB = 128, 8
    Hp, Vp = _round_up(H, LANE), _round_up(V, LANE)
    Nk = _round_up(N, LANE)
    Bp = _round_up(B, SUB)
    f32, bf16 = jnp.float32, jnp.bfloat16

    # ---- precompute / pad parameters (tiny, one-time, outside the kernel) ----
    def pad_gate_blocks(a, rows, rows_p, dtype):   # (rows, 3H) -> (rows_p, 3*Hp)
        out = jnp.zeros((rows_p, 3 * Hp), dtype)
        for g in range(3):
            out = out.at[:rows, g * Hp:g * Hp + H].set(
                a[:, g * H:(g + 1) * H].astype(dtype))
        return out

    # Fold b_ih (all gates) + b_hh (r,z gates) into the precomputed input-
    # projection table; the n-gate part of b_hh must stay inside r*(...) per
    # PyTorch GRU semantics.
    b_comb = b_ih.astype(f32) + jnp.concatenate(
        [b_hh[:, :2 * H].astype(f32), jnp.zeros((1, H), f32)], axis=1)
    gi_raw = char_emb.astype(f32) @ w_ih.astype(f32) + b_comb       # (V, 3H)
    gi_table_p = pad_gate_blocks(gi_raw, V, Vp, f32)                # (Vp, 3Hp)

    nation_emb_p = jnp.zeros((Nk, Hp), f32).at[:N, :H].set(nation_emb.astype(f32))

    w_hh_p = pad_gate_blocks(w_hh, H, Hp, bf16)                     # bf16 MXU operand
    b_hn_p = jnp.zeros((1, Hp), f32).at[:, :H].set(b_hh[:, 2 * H:3 * H].astype(f32))

    w_fc_p = jnp.zeros((Hp, Vp), bf16).at[:H, :V].set(w_fc.astype(bf16))
    b_fc_p = jnp.zeros((1, Vp), f32).at[:, :V].set(b_fc.astype(f32))

    # Time-major index arrays; padding rows get -1 (matches no one-hot column).
    x_tm = jnp.full((T, Bp), -1, jnp.int32).at[:, :B].set(
        jnp.transpose(x_in.astype(jnp.int32)))
    x_idx_tm = x_tm.reshape(T * Bp, 1)
    nat_idx_p = jnp.full((Bp, 1), -1, jnp.int32).at[:B, 0].set(
        nationality_index.astype(jnp.int32))

    kernel = functools.partial(_surname_kernel, T=T, Bp=Bp, Hp=Hp, Vp=Vp,
                               Nk=Nk, V=V, apply_softmax=apply_softmax)

    vmem = pl.BlockSpec(memory_space=pltpu.MemorySpace.VMEM)

    y_flat = pl.pallas_call(
        kernel,
        out_shape=jax.ShapeDtypeStruct((T * Bp, Vp), f32),
        in_specs=[vmem, vmem,                     # index arrays (drive one-hot matmuls)
                  vmem, vmem,                     # gi_table, nation embedding
                  vmem, vmem,                     # GRU hidden weight / n-gate bias
                  vmem, vmem],                    # FC weight / bias
        out_specs=vmem,
        scratch_shapes=[
            pltpu.VMEM((T * Bp, Hp), f32),        # per-step hidden states (FC input)
        ],
        compiler_params=pltpu.CompilerParams(
            vmem_limit_bytes=16 * 1024 * 1024),   # explicit budget; actual use << 1 MiB
    )(x_idx_tm, nat_idx_p, gi_table_p, nation_emb_p,
      w_hh_p, b_hn_p, w_fc_p, b_fc_p)

    # (T*Bp, Vp) time-major -> (B, T, V) batch-first; ~32 KiB, negligible.
    y_tm = y_flat.reshape(T, Bp, Vp)
    return jnp.transpose(y_tm[:, :B, :V], (1, 0, 2))


def surname_generation_reference(x_in, nationality_index, params, apply_softmax=False):
    """Pure-JAX reference (same math as PyTorch GRU + Linear, eval-mode dropout)."""
    char_emb, nation_emb = params["char_emb"], params["nation_emb"]
    w_ih, w_hh = params["w_ih"], params["w_hh"]
    b_ih, b_hh = params["b_ih"], params["b_hh"]
    w_fc, b_fc = params["w_fc"], params["b_fc"]
    B, T = x_in.shape
    H = nation_emb.shape[1]

    x = jnp.take(char_emb, x_in, axis=0)                        # (B, T, E)
    h = jnp.take(nation_emb, nationality_index, axis=0)         # (B, H)
    hs = []
    for t in range(T):
        gi = x[:, t, :] @ w_ih + b_ih
        gh = h @ w_hh + b_hh
        r = jax.nn.sigmoid(gi[:, :H] + gh[:, :H])
        z = jax.nn.sigmoid(gi[:, H:2 * H] + gh[:, H:2 * H])
        n = jnp.tanh(gi[:, 2 * H:] + r * gh[:, 2 * H:])
        h = (1.0 - z) * n + z * h
        hs.append(h)
    y = jnp.stack(hs, axis=1) @ w_fc + b_fc                     # (B, T, V)
    if apply_softmax:
        y = jax.nn.softmax(y, axis=-1)
    return y


def init_params(key, char_vocab_size, char_embedding_size, num_nationalities,
                rnn_hidden_size, padding_idx=0):
    V, E, N, H = char_vocab_size, char_embedding_size, num_nationalities, rnn_hidden_size
    keys = jax.random.split(key, 8)
    scale = 0.1

    char_emb = scale * jax.random.normal(keys[0], (V, E), jnp.float32)
    char_emb = char_emb.at[padding_idx].set(0.0)   # nn.Embedding padding_idx row is zero

    nation_emb = scale * jax.random.normal(keys[1], (N, H), jnp.float32)

    # PyTorch GRU weights are (3H, E)/(3H, H) with gate order (r, z, n);
    # stored transposed here for right-multiplication.
    w_ih = scale * jax.random.normal(keys[2], (E, 3 * H), jnp.float32)
    w_hh = scale * jax.random.normal(keys[3], (H, 3 * H), jnp.float32)
    b_ih = scale * jax.random.normal(keys[4], (1, 3 * H), jnp.float32)
    b_hh = scale * jax.random.normal(keys[5], (1, 3 * H), jnp.float32)

    # nn.Linear weight is (V, H); stored transposed as (H, V).
    w_fc = scale * jax.random.normal(keys[6], (H, V), jnp.float32)
    b_fc = scale * jax.random.normal(keys[7], (1, V), jnp.float32)

    return {"char_emb": char_emb, "nation_emb": nation_emb,
            "w_ih": w_ih, "w_hh": w_hh, "b_ih": b_ih, "b_hh": b_hh,
            "w_fc": w_fc, "b_fc": b_fc}


if __name__ == "__main__":
    B, T = 2, 8                 # batch, sequence length
    char_vocab_size = 32        # V
    char_embedding_size = 32    # E
    num_nationalities = 4       # N
    rnn_hidden_size = 32        # H

    key = jax.random.PRNGKey(0)
    k_params, k_x, k_nat = jax.random.split(key, 3)

    params = init_params(k_params, char_vocab_size, char_embedding_size,
                         num_nationalities, rnn_hidden_size, padding_idx=0)

    x_in = jax.random.randint(k_x, (B, T), 0, char_vocab_size, dtype=jnp.int32)
    nationality_index = jax.random.randint(k_nat, (B,), 0, num_nationalities,
                                           dtype=jnp.int32)

    # Logits path.
    y_out = surname_generation_forward(x_in, nationality_index, params,
                                       apply_softmax=False)
    y_out = jax.block_until_ready(y_out)
    assert y_out.shape == (B, T, char_vocab_size)
    y_ref = surname_generation_reference(x_in, nationality_index, params,
                                         apply_softmax=False)
    np.testing.assert_allclose(np.asarray(y_out), np.asarray(y_ref),
                               atol=3e-2, rtol=3e-2)

    # Softmax path.
    y_sm = surname_generation_forward(x_in, nationality_index, params,
                                      apply_softmax=True)
    y_sm = jax.block_until_ready(y_sm)
    assert y_sm.shape == (B, T, char_vocab_size)
    y_sm_ref = surname_generation_reference(x_in, nationality_index, params,
                                            apply_softmax=True)
    np.testing.assert_allclose(np.asarray(y_sm), np.asarray(y_sm_ref),
                               atol=3e-2, rtol=3e-2)

    print("KERNEL_OK")
</pallas_src>

<mosaic_0001>
module attributes {stable_mosaic.version = 11 : i64} {
  func.func @_surname_kernel(%arg0: memref<64x1xi32, #tpu.memory_space<vmem>>, %arg1: memref<8x1xi32, #tpu.memory_space<vmem>>, %arg2: memref<128x384xf32, #tpu.memory_space<vmem>>, %arg3: memref<128x128xf32, #tpu.memory_space<vmem>>, %arg4: memref<128x384xbf16, #tpu.memory_space<vmem>>, %arg5: memref<1x128xf32, #tpu.memory_space<vmem>>, %arg6: memref<128x128xbf16, #tpu.memory_space<vmem>>, %arg7: memref<1x128xf32, #tpu.memory_space<vmem>>, %arg8: memref<64x128xf32, #tpu.memory_space<vmem>>, %arg9: memref<64x128xf32, #tpu.memory_space<vmem>>) attributes {dimension_semantics = [], scalar_prefetch = 0 : i64, scratch_operands = 1 : i64, tpu.core_type = #tpu.core_type<tc>} {
    %c0 = arith.constant 0 : index
    %c0_0 = arith.constant 0 : index
    %0 = vector.load %arg0[%c0, %c0_0] : memref<64x1xi32, #tpu.memory_space<vmem>>, vector<64x1xi32>
    %1 = tpu.iota {dimensions = array<i32: 1>} : vector<64x128xi32>
    %2 = vector.broadcast %0 : vector<64x1xi32> to vector<64x128xi32>
    %3 = arith.cmpi eq, %2, %1 : vector<64x128xi32>
    %4 = arith.extui %3 : vector<64x128xi1> to vector<64x128xi32>
    %5 = arith.sitofp %4 : vector<64x128xi32> to vector<64x128xf32>
    %c0_1 = arith.constant 0 : index
    %c0_2 = arith.constant 0 : index
    %6 = vector.load %arg2[%c0_1, %c0_2] : memref<128x384xf32, #tpu.memory_space<vmem>>, vector<128x384xf32>
    %cst = arith.constant dense<0.000000e+00> : vector<64x384xf32>
    %7 = tpu.matmul %5, %6, %cst {dimension_numbers = #tpu.dot_dimension_numbers<[1], [0], [0], [1], [0, 0, 1, 1], [], []>} : vector<64x128xf32>, vector<128x384xf32>, vector<64x384xf32> -> vector<64x384xf32>
    %c0_3 = arith.constant 0 : index
    %c0_4 = arith.constant 0 : index
    %8 = vector.load %arg1[%c0_3, %c0_4] : memref<8x1xi32, #tpu.memory_space<vmem>>, vector<8x1xi32>
    %9 = tpu.iota {dimensions = array<i32: 1>} : vector<8x128xi32>
    %10 = vector.broadcast %8 : vector<8x1xi32> to vector<8x128xi32>
    %11 = arith.cmpi eq, %10, %9 : vector<8x128xi32>
    %12 = arith.extui %11 : vector<8x128xi1> to vector<8x128xi32>
    %13 = arith.sitofp %12 : vector<8x128xi32> to vector<8x128xf32>
    %c0_5 = arith.constant 0 : index
    %c0_6 = arith.constant 0 : index
    %14 = vector.load %arg3[%c0_5, %c0_6] : memref<128x128xf32, #tpu.memory_space<vmem>>, vector<128x128xf32>
    %cst_7 = arith.constant dense<0.000000e+00> : vector<8x128xf32>
    %15 = tpu.matmul %13, %14, %cst_7 {dimension_numbers = #tpu.dot_dimension_numbers<[1], [0], [0], [1], [0, 0, 1, 1], [], []>} : vector<8x128xf32>, vector<128x128xf32>, vector<8x128xf32> -> vector<8x128xf32>
    %c0_8 = arith.constant 0 : index
    %c0_9 = arith.constant 0 : index
    %16 = vector.load %arg4[%c0_8, %c0_9] : memref<128x384xbf16, #tpu.memory_space<vmem>>, vector<128x384xbf16>
    %c0_10 = arith.constant 0 : index
    %c0_11 = arith.constant 0 : index
    %17 = vector.load %arg5[%c0_10, %c0_11] : memref<1x128xf32, #tpu.memory_space<vmem>>, vector<1x128xf32>
    %18 = vector.shape_cast %17 : vector<1x128xf32> to vector<1x128xf32>
    %19 = vector.broadcast %18 : vector<1x128xf32> to vector<8x128xf32>
    %20 = vector.extract_strided_slice %7 {offsets = [0, 0], sizes = [8, 384], strides = [1, 1]} : vector<64x384xf32> to vector<8x384xf32>
    %21 = arith.truncf %15 : vector<8x128xf32> to vector<8x128xbf16>
    %cst_12 = arith.constant dense<0.000000e+00> : vector<8x384xf32>
    %22 = tpu.matmul %21, %16, %cst_12 {dimension_numbers = #tpu.dot_dimension_numbers<[1], [0], [0], [1], [0, 0, 1, 1], [], []>} : vector<8x128xbf16>, vector<128x384xbf16>, vector<8x384xf32> -> vector<8x384xf32>
    %23 = vector.extract_strided_slice %20 {offsets = [0, 0], sizes = [8, 256], strides = [1, 1]} : vector<8x384xf32> to vector<8x256xf32>
    %24 = vector.extract_strided_slice %22 {offsets = [0, 0], sizes = [8, 256], strides = [1, 1]} : vector<8x384xf32> to vector<8x256xf32>
    %25 = arith.addf %23, %24 : vector<8x256xf32>
    %26 = arith.negf %25 : vector<8x256xf32>
    %27 = math.exp %26 : vector<8x256xf32>
    %cst_13 = arith.constant 1.000000e+00 : f32
    %28 = vector.broadcast %cst_13 : f32 to vector<8x256xf32>
    %29 = arith.addf %28, %27 : vector<8x256xf32>
    %30 = arith.divf %28, %29 : vector<8x256xf32>
    %31 = vector.extract_strided_slice %30 {offsets = [0, 0], sizes = [8, 128], strides = [1, 1]} : vector<8x256xf32> to vector<8x128xf32>
    %32 = vector.extract_strided_slice %30 {offsets = [0, 128], sizes = [8, 128], strides = [1, 1]} : vector<8x256xf32> to vector<8x128xf32>
    %33 = vector.extract_strided_slice %20 {offsets = [0, 256], sizes = [8, 128], strides = [1, 1]} : vector<8x384xf32> to vector<8x128xf32>
    %34 = vector.extract_strided_slice %22 {offsets = [0, 256], sizes = [8, 128], strides = [1, 1]} : vector<8x384xf32> to vector<8x128xf32>
    %35 = arith.addf %34, %19 : vector<8x128xf32>
    %36 = arith.mulf %31, %35 : vector<8x128xf32>
    %37 = arith.addf %33, %36 : vector<8x128xf32>
    %38 = math.tanh %37 : vector<8x128xf32>
    %39 = arith.subf %15, %38 : vector<8x128xf32>
    %40 = arith.mulf %32, %39 : vector<8x128xf32>
    %41 = arith.addf %38, %40 : vector<8x128xf32>
    %c0_14 = arith.constant 0 : index
    %c0_15 = arith.constant 0 : index
    %42 = vector.load %arg9[%c0_14, %c0_15] : memref<64x128xf32, #tpu.memory_space<vmem>>, vector<8x128xf32>
    tpu.vector_store %arg9[%c0_14, %c0_15], %41 {strides = array<i32>} : memref<64x128xf32, #tpu.memory_space<vmem>>, vector<8x128xf32>,
    %43 = vector.extract_strided_slice %7 {offsets = [8, 0], sizes = [8, 384], strides = [1, 1]} : vector<64x384xf32> to vector<8x384xf32>
    %44 = arith.truncf %41 : vector<8x128xf32> to vector<8x128xbf16>
    %cst_16 = arith.constant dense<0.000000e+00> : vector<8x384xf32>
    %45 = tpu.matmul %44, %16, %cst_16 {dimension_numbers = #tpu.dot_dimension_numbers<[1], [0], [0], [1], [0, 0, 1, 1], [], []>} : vector<8x128xbf16>, vector<128x384xbf16>, vector<8x384xf32> -> vector<8x384xf32>
    %46 = vector.extract_strided_slice %43 {offsets = [0, 0], sizes = [8, 256], strides = [1, 1]} : vector<8x384xf32> to vector<8x256xf32>
    %47 = vector.extract_strided_slice %45 {offsets = [0, 0], sizes = [8, 256], strides = [1, 1]} : vector<8x384xf32> to vector<8x256xf32>
    %48 = arith.addf %46, %47 : vector<8x256xf32>
    %49 = arith.negf %48 : vector<8x256xf32>
    %50 = math.exp %49 : vector<8x256xf32>
    %cst_17 = arith.constant 1.000000e+00 : f32
    %51 = vector.broadcast %cst_17 : f32 to vector<8x256xf32>
    %52 = arith.addf %51, %50 : vector<8x256xf32>
    %53 = arith.divf %51, %52 : vector<8x256xf32>
    %54 = vector.extract_strided_slice %53 {offsets = [0, 0], sizes = [8, 128], strides = [1, 1]} : vector<8x256xf32> to vector<8x128xf32>
    %55 = vector.extract_strided_slice %53 {offsets = [0, 128], sizes = [8, 128], strides = [1, 1]} : vector<8x256xf32> to vector<8x128xf32>
    %56 = vector.extract_strided_slice %43 {offsets = [0, 256], sizes = [8, 128], strides = [1, 1]} : vector<8x384xf32> to vector<8x128xf32>
    %57 = vector.extract_strided_slice %45 {offsets = [0, 256], sizes = [8, 128], strides = [1, 1]} : vector<8x384xf32> to vector<8x128xf32>
    %58 = arith.addf %57, %19 : vector<8x128xf32>
    %59 = arith.mulf %54, %58 : vector<8x128xf32>
    %60 = arith.addf %56, %59 : vector<8x128xf32>
    %61 = math.tanh %60 : vector<8x128xf32>
    %62 = arith.subf %41, %61 : vector<8x128xf32>
    %63 = arith.mulf %55, %62 : vector<8x128xf32>
    %64 = arith.addf %61, %63 : vector<8x128xf32>
    %c8 = arith.constant 8 : index
    %c0_18 = arith.constant 0 : index
    %65 = vector.load %arg9[%c8, %c0_18] : memref<64x128xf32, #tpu.memory_space<vmem>>, vector<8x128xf32>
    tpu.vector_store %arg9[%c8, %c0_18], %64 {strides = array<i32>} : memref<64x128xf32, #tpu.memory_space<vmem>>, vector<8x128xf32>,
    %66 = vector.extract_strided_slice %7 {offsets = [16, 0], sizes = [8, 384], strides = [1, 1]} : vector<64x384xf32> to vector<8x384xf32>
    %67 = arith.truncf %64 : vector<8x128xf32> to vector<8x128xbf16>
    %cst_19 = arith.constant dense<0.000000e+00> : vector<8x384xf32>
    %68 = tpu.matmul %67, %16, %cst_19 {dimension_numbers = #tpu.dot_dimension_numbers<[1], [0], [0], [1], [0, 0, 1, 1], [], []>} : vector<8x128xbf16>, vector<128x384xbf16>, vector<8x384xf32> -> vector<8x384xf32>
    %69 = vector.extract_strided_slice %66 {offsets = [0, 0], sizes = [8, 256], strides = [1, 1]} : vector<8x384xf32> to vector<8x256xf32>
    %70 = vector.extract_strided_slice %68 {offsets = [0, 0], sizes = [8, 256], strides = [1, 1]} : vector<8x384xf32> to vector<8x256xf32>
    %71 = arith.addf %69, %70 : vector<8x256xf32>
    %72 = arith.negf %71 : vector<8x256xf32>
    %73 = math.exp %72 : vector<8x256xf32>
    %cst_20 = arith.constant 1.000000e+00 : f32
    %74 = vector.broadcast %cst_20 : f32 to vector<8x256xf32>
    %75 = arith.addf %74, %73 : vector<8x256xf32>
    %76 = arith.divf %74, %75 : vector<8x256xf32>
    %77 = vector.extract_strided_slice %76 {offsets = [0, 0], sizes = [8, 128], strides = [1, 1]} : vector<8x256xf32> to vector<8x128xf32>
    %78 = vector.extract_strided_slice %76 {offsets = [0, 128], sizes = [8, 128], strides = [1, 1]} : vector<8x256xf32> to vector<8x128xf32>
    %79 = vector.extract_strided_slice %66 {offsets = [0, 256], sizes = [8, 128], strides = [1, 1]} : vector<8x384xf32> to vector<8x128xf32>
    %80 = vector.extract_strided_slice %68 {offsets = [0, 256], sizes = [8, 128], strides = [1, 1]} : vector<8x384xf32> to vector<8x128xf32>
    %81 = arith.addf %80, %19 : vector<8x128xf32>
    %82 = arith.mulf %77, %81 : vector<8x128xf32>
    %83 = arith.addf %79, %82 : vector<8x128xf32>
    %84 = math.tanh %83 : vector<8x128xf32>
    %85 = arith.subf %64, %84 : vector<8x128xf32>
    %86 = arith.mulf %78, %85 : vector<8x128xf32>
    %87 = arith.addf %84, %86 : vector<8x128xf32>
    %c16 = arith.constant 16 : index
    %c0_21 = arith.constant 0 : index
    %88 = vector.load %arg9[%c16, %c0_21] : memref<64x128xf32, #tpu.memory_space<vmem>>, vector<8x128xf32>
    tpu.vector_store %arg9[%c16, %c0_21], %87 {strides = array<i32>} : memref<64x128xf32, #tpu.memory_space<vmem>>, vector<8x128xf32>,
    %89 = vector.extract_strided_slice %7 {offsets = [24, 0], sizes = [8, 384], strides = [1, 1]} : vector<64x384xf32> to vector<8x384xf32>
    %90 = arith.truncf %87 : vector<8x128xf32> to vector<8x128xbf16>
    %cst_22 = arith.constant dense<0.000000e+00> : vector<8x384xf32>
    %91 = tpu.matmul %90, %16, %cst_22 {dimension_numbers = #tpu.dot_dimension_numbers<[1], [0], [0], [1], [0, 0, 1, 1], [], []>} : vector<8x128xbf16>, vector<128x384xbf16>, vector<8x384xf32> -> vector<8x384xf32>
    %92 = vector.extract_strided_slice %89 {offsets = [0, 0], sizes = [8, 256], strides = [1, 1]} : vector<8x384xf32> to vector<8x256xf32>
    %93 = vector.extract_strided_slice %91 {offsets = [0, 0], sizes = [8, 256], strides = [1, 1]} : vector<8x384xf32> to vector<8x256xf32>
    %94 = arith.addf %92, %93 : vector<8x256xf32>
    %95 = arith.negf %94 : vector<8x256xf32>
    %96 = math.exp %95 : vector<8x256xf32>
    %cst_23 = arith.constant 1.000000e+00 : f32
    %97 = vector.broadcast %cst_23 : f32 to vector<8x256xf32>
    %98 = arith.addf %97, %96 : vector<8x256xf32>
    %99 = arith.divf %97, %98 : vector<8x256xf32>
    %100 = vector.extract_strided_slice %99 {offsets = [0, 0], sizes = [8, 128], strides = [1, 1]} : vector<8x256xf32> to vector<8x128xf32>
    %101 = vector.extract_strided_slice %99 {offsets = [0, 128], sizes = [8, 128], strides = [1, 1]} : vector<8x256xf32> to vector<8x128xf32>
    %102 = vector.extract_strided_slice %89 {offsets = [0, 256], sizes = [8, 128], strides = [1, 1]} : vector<8x384xf32> to vector<8x128xf32>
    %103 = vector.extract_strided_slice %91 {offsets = [0, 256], sizes = [8, 128], strides = [1, 1]} : vector<8x384xf32> to vector<8x128xf32>
    %104 = arith.addf %103, %19 : vector<8x128xf32>
    %105 = arith.mulf %100, %104 : vector<8x128xf32>
    %106 = arith.addf %102, %105 : vector<8x128xf32>
    %107 = math.tanh %106 : vector<8x128xf32>
    %108 = arith.subf %87, %107 : vector<8x128xf32>
    %109 = arith.mulf %101, %108 : vector<8x128xf32>
    %110 = arith.addf %107, %109 : vector<8x128xf32>
    %c24 = arith.constant 24 : index
    %c0_24 = arith.constant 0 : index
    %111 = vector.load %arg9[%c24, %c0_24] : memref<64x128xf32, #tpu.memory_space<vmem>>, vector<8x128xf32>
    tpu.vector_store %arg9[%c24, %c0_24], %110 {strides = array<i32>} : memref<64x128xf32, #tpu.memory_space<vmem>>, vector<8x128xf32>,
    %112 = vector.extract_strided_slice %7 {offsets = [32, 0], sizes = [8, 384], strides = [1, 1]} : vector<64x384xf32> to vector<8x384xf32>
    %113 = arith.truncf %110 : vector<8x128xf32> to vector<8x128xbf16>
    %cst_25 = arith.constant dense<0.000000e+00> : vector<8x384xf32>
    %114 = tpu.matmul %113, %16, %cst_25 {dimension_numbers = #tpu.dot_dimension_numbers<[1], [0], [0], [1], [0, 0, 1, 1], [], []>} : vector<8x128xbf16>, vector<128x384xbf16>, vector<8x384xf32> -> vector<8x384xf32>
    %115 = vector.extract_strided_slice %112 {offsets = [0, 0], sizes = [8, 256], strides = [1, 1]} : vector<8x384xf32> to vector<8x256xf32>
    %116 = vector.extract_strided_slice %114 {offsets = [0, 0], sizes = [8, 256], strides = [1, 1]} : vector<8x384xf32> to vector<8x256xf32>
    %117 = arith.addf %115, %116 : vector<8x256xf32>
    %118 = arith.negf %117 : vector<8x256xf32>
    %119 = math.exp %118 : vector<8x256xf32>
    %cst_26 = arith.constant 1.000000e+00 : f32
    %120 = vector.broadcast %cst_26 : f32 to vector<8x256xf32>
    %121 = arith.addf %120, %119 : vector<8x256xf32>
    %122 = arith.divf %120, %121 : vector<8x256xf32>
    %123 = vector.extract_strided_slice %122 {offsets = [0, 0], sizes = [8, 128], strides = [1, 1]} : vector<8x256xf32> to vector<8x128xf32>
    %124 = vector.extract_strided_slice %122 {offsets = [0, 128], sizes = [8, 128], strides = [1, 1]} : vector<8x256xf32> to vector<8x128xf32>
    %125 = vector.extract_strided_slice %112 {offsets = [0, 256], sizes = [8, 128], strides = [1, 1]} : vector<8x384xf32> to vector<8x128xf32>
    %126 = vector.extract_strided_slice %114 {offsets = [0, 256], sizes = [8, 128], strides = [1, 1]} : vector<8x384xf32> to vector<8x128xf32>
    %127 = arith.addf %126, %19 : vector<8x128xf32>
    %128 = arith.mulf %123, %127 : vector<8x128xf32>
    %129 = arith.addf %125, %128 : vector<8x128xf32>
    %130 = math.tanh %129 : vector<8x128xf32>
    %131 = arith.subf %110, %130 : vector<8x128xf32>
    %132 = arith.mulf %124, %131 : vector<8x128xf32>
    %133 = arith.addf %130, %132 : vector<8x128xf32>
    %c32 = arith.constant 32 : index
    %c0_27 = arith.constant 0 : index
    %134 = vector.load %arg9[%c32, %c0_27] : memref<64x128xf32, #tpu.memory_space<vmem>>, vector<8x128xf32>
    tpu.vector_store %arg9[%c32, %c0_27], %133 {strides = array<i32>} : memref<64x128xf32, #tpu.memory_space<vmem>>, vector<8x128xf32>,
    %135 = vector.extract_strided_slice %7 {offsets = [40, 0], sizes = [8, 384], strides = [1, 1]} : vector<64x384xf32> to vector<8x384xf32>
    %136 = arith.truncf %133 : vector<8x128xf32> to vector<8x128xbf16>
    %cst_28 = arith.constant dense<0.000000e+00> : vector<8x384xf32>
    %137 = tpu.matmul %136, %16, %cst_28 {dimension_numbers = #tpu.dot_dimension_numbers<[1], [0], [0], [1], [0, 0, 1, 1], [], []>} : vector<8x128xbf16>, vector<128x384xbf16>, vector<8x384xf32> -> vector<8x384xf32>
    %138 = vector.extract_strided_slice %135 {offsets = [0, 0], sizes = [8, 256], strides = [1, 1]} : vector<8x384xf32> to vector<8x256xf32>
    %139 = vector.extract_strided_slice %137 {offsets = [0, 0], sizes = [8, 256], strides = [1, 1]} : vector<8x384xf32> to vector<8x256xf32>
    %140 = arith.addf %138, %139 : vector<8x256xf32>
    %141 = arith.negf %140 : vector<8x256xf32>
    %142 = math.exp %141 : vector<8x256xf32>
    %cst_29 = arith.constant 1.000000e+00 : f32
    %143 = vector.broadcast %cst_29 : f32 to vector<8x256xf32>
    %144 = arith.addf %143, %142 : vector<8x256xf32>
    %145 = arith.divf %143, %144 : vector<8x256xf32>
    %146 = vector.extract_strided_slice %145 {offsets = [0, 0], sizes = [8, 128], strides = [1, 1]} : vector<8x256xf32> to vector<8x128xf32>
    %147 = vector.extract_strided_slice %145 {offsets = [0, 128], sizes = [8, 128], strides = [1, 1]} : vector<8x256xf32> to vector<8x128xf32>
    %148 = vector.extract_strided_slice %135 {offsets = [0, 256], sizes = [8, 128], strides = [1, 1]} : vector<8x384xf32> to vector<8x128xf32>
    %149 = vector.extract_strided_slice %137 {offsets = [0, 256], sizes = [8, 128], strides = [1, 1]} : vector<8x384xf32> to vector<8x128xf32>
    %150 = arith.addf %149, %19 : vector<8x128xf32>
    %151 = arith.mulf %146, %150 : vector<8x128xf32>
    %152 = arith.addf %148, %151 : vector<8x128xf32>
    %153 = math.tanh %152 : vector<8x128xf32>
    %154 = arith.subf %133, %153 : vector<8x128xf32>
    %155 = arith.mulf %147, %154 : vector<8x128xf32>
    %156 = arith.addf %153, %155 : vector<8x128xf32>
    %c40 = arith.constant 40 : index
    %c0_30 = arith.constant 0 : index
    %157 = vector.load %arg9[%c40, %c0_30] : memref<64x128xf32, #tpu.memory_space<vmem>>, vector<8x128xf32>
    tpu.vector_store %arg9[%c40, %c0_30], %156 {strides = array<i32>} : memref<64x128xf32, #tpu.memory_space<vmem>>, vector<8x128xf32>,
    %158 = vector.extract_strided_slice %7 {offsets = [48, 0], sizes = [8, 384], strides = [1, 1]} : vector<64x384xf32> to vector<8x384xf32>
    %159 = arith.truncf %156 : vector<8x128xf32> to vector<8x128xbf16>
    %cst_31 = arith.constant dense<0.000000e+00> : vector<8x384xf32>
    %160 = tpu.matmul %159, %16, %cst_31 {dimension_numbers = #tpu.dot_dimension_numbers<[1], [0], [0], [1], [0, 0, 1, 1], [], []>} : vector<8x128xbf16>, vector<128x384xbf16>, vector<8x384xf32> -> vector<8x384xf32>
    %161 = vector.extract_strided_slice %158 {offsets = [0, 0], sizes = [8, 256], strides = [1, 1]} : vector<8x384xf32> to vector<8x256xf32>
    %162 = vector.extract_strided_slice %160 {offsets = [0, 0], sizes = [8, 256], strides = [1, 1]} : vector<8x384xf32> to vector<8x256xf32>
    %163 = arith.addf %161, %162 : vector<8x256xf32>
    %164 = arith.negf %163 : vector<8x256xf32>
    %165 = math.exp %164 : vector<8x256xf32>
    %cst_32 = arith.constant 1.000000e+00 : f32
    %166 = vector.broadcast %cst_32 : f32 to vector<8x256xf32>
    %167 = arith.addf %166, %165 : vector<8x256xf32>
    %168 = arith.divf %166, %167 : vector<8x256xf32>
    %169 = vector.extract_strided_slice %168 {offsets = [0, 0], sizes = [8, 128], strides = [1, 1]} : vector<8x256xf32> to vector<8x128xf32>
    %170 = vector.extract_strided_slice %168 {offsets = [0, 128], sizes = [8, 128], strides = [1, 1]} : vector<8x256xf32> to vector<8x128xf32>
    %171 = vector.extract_strided_slice %158 {offsets = [0, 256], sizes = [8, 128], strides = [1, 1]} : vector<8x384xf32> to vector<8x128xf32>
    %172 = vector.extract_strided_slice %160 {offsets = [0, 256], sizes = [8, 128], strides = [1, 1]} : vector<8x384xf32> to vector<8x128xf32>
    %173 = arith.addf %172, %19 : vector<8x128xf32>
    %174 = arith.mulf %169, %173 : vector<8x128xf32>
    %175 = arith.addf %171, %174 : vector<8x128xf32>
    %176 = math.tanh %175 : vector<8x128xf32>
    %177 = arith.subf %156, %176 : vector<8x128xf32>
    %178 = arith.mulf %170, %177 : vector<8x128xf32>
    %179 = arith.addf %176, %178 : vector<8x128xf32>
    %c48 = arith.constant 48 : index
    %c0_33 = arith.constant 0 : index
    %180 = vector.load %arg9[%c48, %c0_33] : memref<64x128xf32, #tpu.memory_space<vmem>>, vector<8x128xf32>
    tpu.vector_store %arg9[%c48, %c0_33], %179 {strides = array<i32>} : memref<64x128xf32, #tpu.memory_space<vmem>>, vector<8x128xf32>,
    %181 = vector.extract_strided_slice %7 {offsets = [56, 0], sizes = [8, 384], strides = [1, 1]} : vector<64x384xf32> to vector<8x384xf32>
    %182 = arith.truncf %179 : vector<8x128xf32> to vector<8x128xbf16>
    %cst_34 = arith.constant dense<0.000000e+00> : vector<8x384xf32>
    %183 = tpu.matmul %182, %16, %cst_34 {dimension_numbers = #tpu.dot_dimension_numbers<[1], [0], [0], [1], [0, 0, 1, 1], [], []>} : vector<8x128xbf16>, vector<128x384xbf16>, vector<8x384xf32> -> vector<8x384xf32>
    %184 = vector.extract_strided_slice %181 {offsets = [0, 0], sizes = [8, 256], strides = [1, 1]} : vector<8x384xf32> to vector<8x256xf32>
    %185 = vector.extract_strided_slice %183 {offsets = [0, 0], sizes = [8, 256], strides = [1, 1]} : vector<8x384xf32> to vector<8x256xf32>
    %186 = arith.addf %184, %185 : vector<8x256xf32>
    %187 = arith.negf %186 : vector<8x256xf32>
    %188 = math.exp %187 : vector<8x256xf32>
    %cst_35 = arith.constant 1.000000e+00 : f32
    %189 = vector.broadcast %cst_35 : f32 to vector<8x256xf32>
    %190 = arith.addf %189, %188 : vector<8x256xf32>
    %191 = arith.divf %189, %190 : vector<8x256xf32>
    %192 = vector.extract_strided_slice %191 {offsets = [0, 0], sizes = [8, 128], strides = [1, 1]} : vector<8x256xf32> to vector<8x128xf32>
    %193 = vector.extract_strided_slice %191 {offsets = [0, 128], sizes = [8, 128], strides = [1, 1]} : vector<8x256xf32> to vector<8x128xf32>
    %194 = vector.extract_strided_slice %181 {offsets = [0, 256], sizes = [8, 128], strides = [1, 1]} : vector<8x384xf32> to vector<8x128xf32>
    %195 = vector.extract_strided_slice %183 {offsets = [0, 256], sizes = [8, 128], strides = [1, 1]} : vector<8x384xf32> to vector<8x128xf32>
    %196 = arith.addf %195, %19 : vector<8x128xf32>
    %197 = arith.mulf %192, %196 : vector<8x128xf32>
    %198 = arith.addf %194, %197 : vector<8x128xf32>
    %199 = math.tanh %198 : vector<8x128xf32>
    %200 = arith.subf %179, %199 : vector<8x128xf32>
    %201 = arith.mulf %193, %200 : vector<8x128xf32>
    %202 = arith.addf %199, %201 : vector<8x128xf32>
    %c56 = arith.constant 56 : index
    %c0_36 = arith.constant 0 : index
    %203 = vector.load %arg9[%c56, %c0_36] : memref<64x128xf32, #tpu.memory_space<vmem>>, vector<8x128xf32>
    tpu.vector_store %arg9[%c56, %c0_36], %202 {strides = array<i32>} : memref<64x128xf32, #tpu.memory_space<vmem>>, vector<8x128xf32>,
    %c0_37 = arith.constant 0 : index
    %c0_38 = arith.constant 0 : index
    %204 = vector.load %arg9[%c0_37, %c0_38] : memref<64x128xf32, #tpu.memory_space<vmem>>, vector<64x128xf32>
    %205 = arith.truncf %204 : vector<64x128xf32> to vector<64x128xbf16>
    %c0_39 = arith.constant 0 : index
    %c0_40 = arith.constant 0 : index
    %206 = vector.load %arg6[%c0_39, %c0_40] : memref<128x128xbf16, #tpu.memory_space<vmem>>, vector<128x128xbf16>
    %cst_41 = arith.constant dense<0.000000e+00> : vector<64x128xf32>
    %207 = tpu.matmul %205, %206, %cst_41 {dimension_numbers = #tpu.dot_dimension_numbers<[1], [0], [0], [1], [0, 0, 1, 1], [], []>} : vector<64x128xbf16>, vector<128x128xbf16>, vector<64x128xf32> -> vector<64x128xf32>
    %c0_42 = arith.constant 0 : index
    %c0_43 = arith.constant 0 : index
    %208 = vector.load %arg7[%c0_42, %c0_43] : memref<1x128xf32, #tpu.memory_space<vmem>>, vector<1x128xf32>
    %209 = vector.broadcast %208 : vector<1x128xf32> to vector<64x128xf32>
    %210 = arith.addf %207, %209 : vector<64x128xf32>
    %c0_44 = arith.constant 0 : index
    %c0_45 = arith.constant 0 : index
    %211 = vector.load %arg8[%c0_44, %c0_45] : memref<64x128xf32, #tpu.memory_space<vmem>>, vector<64x128xf32>
    tpu.vector_store %arg8[%c0_44, %c0_45], %210 {strides = array<i32>} : memref<64x128xf32, #tpu.memory_space<vmem>>, vector<64x128xf32>,
    return
  }
}

</mosaic_0001>

<llo_original>
// kernel: surname_generation_forward.1
$region0: #{surname_generation_forward.1}
  #allocation0 [shape = 'u32[]', space=smem, size = 0x4, offset = 0x4, fixed_abs, tag = 'smem constant byte address 0x4 - core index']
  #allocation1 [shape = 'u32[144,128]{1,0:T(1,128)}', space=vmem, size = 0x12000, scoped, tag = 'internal scratch']
  #allocation2 [shape = 'f32[64,128]{1,0:T(8,128)}', space=vmem, size = 0x8000, scoped, tag = 'scratch operand']
  %s0 = inlined_call_operand.vmem [shape: s32[64,1], index: 0, kind: input, shape index: {}]
  %s1 = inlined_call_operand.vmem [shape: s32[8,1], index: 1, kind: input, shape index: {}]
  %s2 = inlined_call_operand.vmem [shape: f32[128,384], index: 2, kind: input, shape index: {}]
  %s3 = inlined_call_operand.vmem [shape: f32[128,128], index: 3, kind: input, shape index: {}]
  %s4 = inlined_call_operand.vmem [shape: bf16[128,384], index: 4, kind: input, shape index: {}]
  %s5 = inlined_call_operand.vmem [shape: f32[1,128], index: 5, kind: input, shape index: {}]
  %s6 = inlined_call_operand.vmem [shape: bf16[128,128], index: 6, kind: input, shape index: {}]
  %s7 = inlined_call_operand.vmem [shape: f32[1,128], index: 7, kind: input, shape index: {}]
  %s8 = inlined_call_operand.vmem [shape: f32[64,128], index: 8, kind: output, shape index: {}]
  %s9 = sld [smem:[#allocation0]]
  $region42: #{surname_generation_forward.1} parent=0
    _
  %s11 = ssub.s32 1, %s9
  %s12 = scalar_select 0, %s11, %s9
  // Predicated region
  $region2: #{surname_generation_forward.1} parent=0 // pred_check
    _
  $region3: #{surname_generation_forward.1} parent=0 // pred_check_branch
    %14 = sbr.rel (0) target = $region5
  $region4: #{surname_generation_forward.1} parent=0 // pred_region
    _
  $region5: #{surname_generation_forward.1} parent=0 // pred_fallthru
    _
  // Predicated region
  $region6: #{surname_generation_forward.1} parent=0 // pred_check
    _
  $region7: #{surname_generation_forward.1} parent=0 // pred_check_branch
    %16 = sbr.rel (0) target = $region9
  $region8: #{surname_generation_forward.1} parent=0 // pred_region
    _
  $region9: #{surname_generation_forward.1} parent=0 // pred_fallthru
    _
  // Predicated region
  $region10: #{surname_generation_forward.1} parent=0 // pred_check
    _
  $region11: #{surname_generation_forward.1} parent=0 // pred_check_branch
    %18 = sbr.rel (0) target = $region13
  $region12: #{surname_generation_forward.1} parent=0 // pred_region
    _
  $region13: #{surname_generation_forward.1} parent=0 // pred_fallthru
    _
  // Predicated region
  $region14: #{surname_generation_forward.1} parent=0 // pred_check
    _
  $region15: #{surname_generation_forward.1} parent=0 // pred_check_branch
    %20 = sbr.rel (0) target = $region17
  $region16: #{surname_generation_forward.1} parent=0 // pred_region
    _
  $region17: #{surname_generation_forward.1} parent=0 // pred_fallthru
    _
  // Predicated region
  $region18: #{surname_generation_forward.1} parent=0 // pred_check
    _
  $region19: #{surname_generation_forward.1} parent=0 // pred_check_branch
    %22 = sbr.rel (0) target = $region21
  $region20: #{surname_generation_forward.1} parent=0 // pred_region
    _
  $region21: #{surname_generation_forward.1} parent=0 // pred_fallthru
    _
  // Predicated region
  $region22: #{surname_generation_forward.1} parent=0 // pred_check
    _
  $region23: #{surname_generation_forward.1} parent=0 // pred_check_branch
    %24 = sbr.rel (0) target = $region25
  $region24: #{surname_generation_forward.1} parent=0 // pred_region
    _
  $region25: #{surname_generation_forward.1} parent=0 // pred_fallthru
    _
  // Predicated region
  $region26: #{surname_generation_forward.1} parent=0 // pred_check
    _
  $region27: #{surname_generation_forward.1} parent=0 // pred_check_branch
    %26 = sbr.rel (0) target = $region29
  $region28: #{surname_generation_forward.1} parent=0 // pred_region
    _
  $region29: #{surname_generation_forward.1} parent=0 // pred_fallthru
    _
  // Predicated region
  $region30: #{surname_generation_forward.1} parent=0 // pred_check
    _
  $region31: #{surname_generation_forward.1} parent=0 // pred_check_branch
    %28 = sbr.rel (0) target = $region33
  $region32: #{surname_generation_forward.1} parent=0 // pred_region
    _
  $region33: #{surname_generation_forward.1} parent=0 // pred_fallthru
    _
  %v30 = vld [vmem:[%s0] sm:$0xff]
  %v31 = vld [vmem:[%s0 + $0x8] sm:$0xff]
  %v32 = vld [vmem:[%s0 + $0x10] sm:$0xff]
  %v33 = vld [vmem:[%s0 + $0x18] sm:$0xff]
  %v34 = vld [vmem:[%s0 + $0x20] sm:$0xff]
  %v35 = vld [vmem:[%s0 + $0x28] sm:$0xff]
  %v36 = vld [vmem:[%s0 + $0x30] sm:$0xff]
  %v37 = vld [vmem:[%s0 + $0x38] sm:$0xff]
  %v38 = vlaneseq
  %v39 = vand.u32 %v38, 127
  %40 = vset.pattern.permute.xlu0 0
  %41 = vperm.xlu0 %40, %v30
  %v42 = vpop.permute.xlu0 %41
  %43 = vset.pattern.permute.xlu0 0
  %44 = vperm.xlu0 %43, %v31
  %v45 = vpop.permute.xlu0 %44
  %46 = vset.pattern.permute.xlu0 0
  %47 = vperm.xlu0 %46, %v32
  %v48 = vpop.permute.xlu0 %47
  %49 = vset.pattern.permute.xlu0 0
  %50 = vperm.xlu0 %49, %v33
  %v51 = vpop.permute.xlu0 %50
  %52 = vset.pattern.permute.xlu0 0
  %53 = vperm.xlu0 %52, %v34
  %v54 = vpop.permute.xlu0 %53
  %55 = vset.pattern.permute.xlu0 0
  %56 = vperm.xlu0 %55, %v35
  %v57 = vpop.permute.xlu0 %56
  %58 = vset.pattern.permute.xlu0 0
  %59 = vperm.xlu0 %58, %v36
  %v60 = vpop.permute.xlu0 %59
  %61 = vset.pattern.permute.xlu0 0
  %62 = vperm.xlu0 %61, %v37
  %v63 = vpop.permute.xlu0 %62
  %vm64 = vcmp.eq.s32.totalorder %v42, %v39
  %vm65 = vcmp.eq.s32.totalorder %v45, %v39
  %vm66 = vcmp.eq.s32.totalorder %v48, %v39
  %vm67 = vcmp.eq.s32.totalorder %v51, %v39
  %vm68 = vcmp.eq.s32.totalorder %v54, %v39
  %vm69 = vcmp.eq.s32.totalorder %v57, %v39
  %vm70 = vcmp.eq.s32.totalorder %v60, %v39
  %vm71 = vcmp.eq.s32.totalorder %v63, %v39
  %v72 = vsel %vm64, 1, 0
  %v73 = vsel %vm65, 1, 0
  %v74 = vsel %vm66, 1, 0
  %v75 = vsel %vm67, 1, 0
  %v76 = vsel %vm68, 1, 0
  %v77 = vsel %vm69, 1, 0
  %v78 = vsel %vm70, 1, 0
  %v79 = vsel %vm71, 1, 0
  %v80 = vcvt.s32.f32 %v72
  %v81 = vcvt.s32.f32 %v73
  %v82 = vcvt.s32.f32 %v74
  %v83 = vcvt.s32.f32 %v75
  %v84 = vcvt.s32.f32 %v76
  %v85 = vcvt.s32.f32 %v77
  %v86 = vcvt.s32.f32 %v78
  %v87 = vcvt.s32.f32 %v79
  %v88 = vld [vmem:[%s2] sm:$0xff]
  %v89 = vld [vmem:[%s2 + $0x8] sm:$0xff]
  %v90 = vld [vmem:[%s2 + $0x10] sm:$0xff]
  %v91 = vld [vmem:[%s2 + $0x18] sm:$0xff]
  %v92 = vld [vmem:[%s2 + $0x20] sm:$0xff]
  %v93 = vld [vmem:[%s2 + $0x28] sm:$0xff]
  %v94 = vld [vmem:[%s2 + $0x30] sm:$0xff]
  %v95 = vld [vmem:[%s2 + $0x38] sm:$0xff]
  %v96 = vld [vmem:[%s2 + $0x40] sm:$0xff]
  %v97 = vld [vmem:[%s2 + $0x48] sm:$0xff]
  %v98 = vld [vmem:[%s2 + $0x50] sm:$0xff]
  %v99 = vld [vmem:[%s2 + $0x58] sm:$0xff]
  %v100 = vld [vmem:[%s2 + $0x60] sm:$0xff]
  %v101 = vld [vmem:[%s2 + $0x68] sm:$0xff]
  %v102 = vld [vmem:[%s2 + $0x70] sm:$0xff]
  %v103 = vld [vmem:[%s2 + $0x78] sm:$0xff]
  %v104 = vld [vmem:[%s2 + $0x80] sm:$0xff]
  %v105 = vld [vmem:[%s2 + $0x88] sm:$0xff]
  %v106 = vld [vmem:[%s2 + $0x90] sm:$0xff]
  %v107 = vld [vmem:[%s2 + $0x98] sm:$0xff]
  %v108 = vld [vmem:[%s2 + $0xa0] sm:$0xff]
  %v109 = vld [vmem:[%s2 + $0xa8] sm:$0xff]
  %v110 = vld [vmem:[%s2 + $0xb0] sm:$0xff]
  %v111 = vld [vmem:[%s2 + $0xb8] sm:$0xff]
  %v112 = vld [vmem:[%s2 + $0xc0] sm:$0xff]
  %v113 = vld [vmem:[%s2 + $0xc8] sm:$0xff]
  %v114 = vld [vmem:[%s2 + $0xd0] sm:$0xff]
  %v115 = vld [vmem:[%s2 + $0xd8] sm:$0xff]
  %v116 = vld [vmem:[%s2 + $0xe0] sm:$0xff]
  %v117 = vld [vmem:[%s2 + $0xe8] sm:$0xff]
  %v118 = vld [vmem:[%s2 + $0xf0] sm:$0xff]
  %v119 = vld [vmem:[%s2 + $0xf8] sm:$0xff]
  %v120 = vld [vmem:[%s2 + $0x100] sm:$0xff]
  %v121 = vld [vmem:[%s2 + $0x108] sm:$0xff]
  %v122 = vld [vmem:[%s2 + $0x110] sm:$0xff]
  %v123 = vld [vmem:[%s2 + $0x118] sm:$0xff]
  %v124 = vld [vmem:[%s2 + $0x120] sm:$0xff]
  %v125 = vld [vmem:[%s2 + $0x128] sm:$0xff]
  %v126 = vld [vmem:[%s2 + $0x130] sm:$0xff]
  %v127 = vld [vmem:[%s2 + $0x138] sm:$0xff]
  %v128 = vld [vmem:[%s2 + $0x140] sm:$0xff]
  %v129 = vld [vmem:[%s2 + $0x148] sm:$0xff]
  %v130 = vld [vmem:[%s2 + $0x150] sm:$0xff]
  %v131 = vld [vmem:[%s2 + $0x158] sm:$0xff]
  %v132 = vld [vmem:[%s2 + $0x160] sm:$0xff]
  %v133 = vld [vmem:[%s2 + $0x168] sm:$0xff]
  %v134 = vld [vmem:[%s2 + $0x170] sm:$0xff]
  %v135 = vld [vmem:[%s2 + $0x178] sm:$0xff]
  %136 = vmatprep.subr.mxu0 %v134
  %137 = vmatpush1.msra.mxu0 %v133
  %138 = vmatprep.subr.mxu0 %v131
  %139 = vmatpush1.msra.mxu0 %v130
  %140 = vmatprep.subr.mxu0 %v128
  %141 = vmatpush1.msra.mxu0 %v127
  %142 = vmatprep.subr.mxu0 %v125
  %143 = vmatpush1.msra.mxu0 %v124
  %144 = vmatprep.subr.mxu0 %v122
  %145 = vmatpush1.msra.mxu0 %v121
  %146 = vmatprep.subr.mxu0 %v119
  %147 = vmatpush1.msra.mxu0 %v118
  %148 = vmatprep.subr.mxu0 %v116
  %149 = vmatpush1.msra.mxu0 %v115
  %150 = vmatprep.subr.mxu0 %v113
  %151 = vmatpush1.msra.mxu0 %v112
  %152 = vmatprep.subr.mxu0 %v110
  %153 = vmatpush1.msra.mxu0 %v109
  %154 = vmatprep.subr.mxu0 %v107
  %155 = vmatpush1.msra.mxu0 %v106
  %156 = vmatprep.subr.mxu0 %v104
  %157 = vmatpush1.msra.mxu0 %v103
  %158 = vmatprep.subr.mxu0 %v101
  %159 = vmatpush1.msra.mxu0 %v100
  %160 = vmatprep.subr.mxu0 %v98
  %161 = vmatpush1.msra.mxu0 %v97
  %162 = vmatprep.subr.mxu0 %v95
  %163 = vmatpush1.msra.mxu0 %v94
  %164 = vmatprep.subr.mxu0 %v92
  %165 = vmatpush1.msra.mxu0 %v91
  %166 = vmatprep.subr.mxu0 %v89
  %167 = vmatpush1.msra.mxu0 %v88
  %168 = vmatprep.subr.mxu0 0.0
  %169 = vmatpush2.msra.mxu0 0.0
  %170 = vmatprep.subr.mxu0 0.0
  %171 = vmatpush2.msra.mxu0 0.0
  %172 = vmatprep.subr.mxu0 0.0
  %173 = vmatpush2.msra.mxu0 0.0
  %174 = vmatprep.subr.mxu0 0.0
  %175 = vmatpush2.msra.mxu0 0.0
  %176 = vmatprep.subr.mxu0 0.0
  %177 = vmatpush2.msra.mxu0 0.0
  %178 = vmatprep.subr.mxu0 0.0
  %179 = vmatpush2.msra.mxu0 0.0
  %180 = vmatprep.subr.mxu0 0.0
  %181 = vmatpush2.msra.mxu0 0.0
  %182 = vmatprep.subr.mxu0 0.0
  %183 = vmatpush2.msra.mxu0 0.0
  %184 = vmatprep.subr.mxu0 0.0
  %185 = vmatpush2.msra.mxu0 0.0
  %186 = vmatprep.subr.mxu0 0.0
  %187 = vmatpush2.msra.mxu0 0.0
  %188 = vmatprep.subr.mxu0 0.0
  %189 = vmatpush2.msra.mxu0 0.0
  %190 = vmatprep.subr.mxu0 0.0
  %191 = vmatpush2.msra.mxu0 0.0
  %192 = vmatprep.subr.mxu0 0.0
  %193 = vmatpush2.msra.mxu0 0.0
  %194 = vmatprep.subr.mxu0 0.0
  %195 = vmatpush2.msra.mxu0 0.0
  %196 = vmatprep.subr.mxu0 0.0
  %197 = vmatpush2.msra.mxu0 0.0
  %198 = vmatprep.subr.mxu0 0.0
  %199 = vmatpush2.msra.mxu0 0.0
  %200 = vmatprep.mubr.f32.mxu0 0.0
  %201 = vmatmul.mubr.f32.gmra.mxu0 %v80
  %v202 = vpop.f32.mrf.mxu0
  %v203 = vadd.f32 0.0, %v202
  %v204 = vpop.f32.mrf.mxu0
  %v205 = vadd.f32 0.0, %v204
  %206 = vmatprep.mubr.f32.mxu0 0.0
  %207 = vmatmul.mubr.f32.gmra.mxu0 %v81
  %v208 = vpop.f32.mrf.mxu0
  %v209 = vadd.f32 0.0, %v208
  %v210 = vpop.f32.mrf.mxu0
  %v211 = vadd.f32 0.0, %v210
  %212 = vmatprep.mubr.f32.mxu0 0.0
  %213 = vmatmul.mubr.f32.gmra.mxu0 %v82
  %v214 = vpop.f32.mrf.mxu0
  %v215 = vadd.f32 0.0, %v214
  %v216 = vpop.f32.mrf.mxu0
  %v217 = vadd.f32 0.0, %v216
  %218 = vmatprep.mubr.f32.mxu0 0.0
  %219 = vmatmul.mubr.f32.gmra.mxu0 %v83
  %v220 = vpop.f32.mrf.mxu0
  %v221 = vadd.f32 0.0, %v220
  %v222 = vpop.f32.mrf.mxu0
  %v223 = vadd.f32 0.0, %v222
  %224 = vmatprep.mubr.f32.mxu0 0.0
  %225 = vmatmul.mubr.f32.gmra.mxu0 %v84
  %v226 = vpop.f32.mrf.mxu0
  %v227 = vadd.f32 0.0, %v226
  %v228 = vpop.f32.mrf.mxu0
  %v229 = vadd.f32 0.0, %v228
  %230 = vmatprep.mubr.f32.mxu0 0.0
  %231 = vmatmul.mubr.f32.gmra.mxu0 %v85
  %v232 = vpop.f32.mrf.mxu0
  %v233 = vadd.f32 0.0, %v232
  %v234 = vpop.f32.mrf.mxu0
  %v235 = vadd.f32 0.0, %v234
  %236 = vmatprep.mubr.f32.mxu0 0.0
  %237 = vmatmul.mubr.f32.gmra.mxu0 %v86
  %v238 = vpop.f32.mrf.mxu0
  %v239 = vadd.f32 0.0, %v238
  %v240 = vpop.f32.mrf.mxu0
  %v241 = vadd.f32 0.0, %v240
  %242 = vmatprep.mubr.f32.mxu0 0.0
  %243 = vmatmul.mubr.f32.gmra.mxu0 %v87
  %v244 = vpop.f32.mrf.mxu0
  %v245 = vadd.f32 0.0, %v244
  %v246 = vpop.f32.mrf.mxu0
  %v247 = vadd.f32 0.0, %v246
  %248 = vdwg.mxu0
  %249 = vmatprep.subr.mxu0 0.0
  %250 = vmatpush1.msra.mxu0 %v135
  %251 = vmatprep.subr.mxu0 0.0
  %252 = vmatpush1.msra.mxu0 %v132
  %253 = vmatprep.subr.mxu0 0.0
  %254 = vmatpush1.msra.mxu0 %v129
  %255 = vmatprep.subr.mxu0 0.0
  %256 = vmatpush1.msra.mxu0 %v126
  %257 = vmatprep.subr.mxu0 0.0
  %258 = vmatpush1.msra.mxu0 %v123
  %259 = vmatprep.subr.mxu0 0.0
  %260 = vmatpush1.msra.mxu0 %v120
  %261 = vmatprep.subr.mxu0 0.0
  %262 = vmatpush1.msra.mxu0 %v117
  %263 = vmatprep.subr.mxu0 0.0
  %264 = vmatpush1.msra.mxu0 %v114
  %265 = vmatprep.subr.mxu0 0.0
  %266 = vmatpush1.msra.mxu0 %v111
  %267 = vmatprep.subr.mxu0 0.0
  %268 = vmatpush1.msra.mxu0 %v108
  %269 = vmatprep.subr.mxu0 0.0
  %270 = vmatpush1.msra.mxu0 %v105
  %271 = vmatprep.subr.mxu0 0.0
  %272 = vmatpush1.msra.mxu0 %v102
  %273 = vmatprep.subr.mxu0 0.0
  %274 = vmatpush1.msra.mxu0 %v99
  %275 = vmatprep.subr.mxu0 0.0
  %276 = vmatpush1.msra.mxu0 %v96
  %277 = vmatprep.subr.mxu0 0.0
  %278 = vmatpush1.msra.mxu0 %v93
  %279 = vmatprep.subr.mxu0 0.0
  %280 = vmatpush1.msra.mxu0 %v90
  %281 = vmatprep.subr.mxu0 0.0
  %282 = vmatpush2.msra.mxu0 0.0
  %283 = vmatprep.subr.mxu0 0.0
  %284 = vmatpush2.msra.mxu0 0.0
  %285 = vmatprep.subr.mxu0 0.0
  %286 = vmatpush2.msra.mxu0 0.0
  %287 = vmatprep.subr.mxu0 0.0
  %288 = vmatpush2.msra.mxu0 0.0
  %289 = vmatprep.subr.mxu0 0.0
  %290 = vmatpush2.msra.mxu0 0.0
  %291 = vmatprep.subr.mxu0 0.0
  %292 = vmatpush2.msra.mxu0 0.0
  %293 = vmatprep.subr.mxu0 0.0
  %294 = vmatpush2.msra.mxu0 0.0
  %295 = vmatprep.subr.mxu0 0.0
  %296 = vmatpush2.msra.mxu0 0.0
  %297 = vmatprep.subr.mxu0 0.0
  %298 = vmatpush2.msra.mxu0 0.0
  %299 = vmatprep.subr.mxu0 0.0
  %300 = vmatpush2.msra.mxu0 0.0
  %301 = vmatprep.subr.mxu0 0.0
  %302 = vmatpush2.msra.mxu0 0.0
  %303 = vmatprep.subr.mxu0 0.0
  %304 = vmatpush2.msra.mxu0 0.0
  %305 = vmatprep.subr.mxu0 0.0
  %306 = vmatpush2.msra.mxu0 0.0
  %307 = vmatprep.subr.mxu0 0.0
  %308 = vmatpush2.msra.mxu0 0.0
  %309 = vmatprep.subr.mxu0 0.0
  %310 = vmatpush2.msra.mxu0 0.0
  %311 = vmatprep.subr.mxu0 0.0
  %312 = vmatpush2.msra.mxu0 0.0
  %313 = vmatprep.mubr.f32.mxu0 0.0
  %314 = vmatmul.mubr.f32.gmra.mxu0 %v80
  %v315 = vpop.f32.mrf.mxu0
  %v316 = vadd.f32 0.0, %v315
  %v317 = vpop.f32.mrf.mxu0
  %318 = vmatprep.mubr.f32.mxu0 0.0
  %319 = vmatmul.mubr.f32.gmra.mxu0 %v81
  %v320 = vpop.f32.mrf.mxu0
  %v321 = vadd.f32 0.0, %v320
  %v322 = vpop.f32.mrf.mxu0
  %323 = vmatprep.mubr.f32.mxu0 0.0
  %324 = vmatmul.mubr.f32.gmra.mxu0 %v82
  %v325 = vpop.f32.mrf.mxu0
  %v326 = vadd.f32 0.0, %v325
  %v327 = vpop.f32.mrf.mxu0
  %328 = vmatprep.mubr.f32.mxu0 0.0
  %329 = vmatmul.mubr.f32.gmra.mxu0 %v83
  %v330 = vpop.f32.mrf.mxu0
  %v331 = vadd.f32 0.0, %v330
  %v332 = vpop.f32.mrf.mxu0
  %333 = vmatprep.mubr.f32.mxu0 0.0
  %334 = vmatmul.mubr.f32.gmra.mxu0 %v84
  %v335 = vpop.f32.mrf.mxu0
  %v336 = vadd.f32 0.0, %v335
  %v337 = vpop.f32.mrf.mxu0
  %338 = vmatprep.mubr.f32.mxu0 0.0
  %339 = vmatmul.mubr.f32.gmra.mxu0 %v85
  %v340 = vpop.f32.mrf.mxu0
  %v341 = vadd.f32 0.0, %v340
  %v342 = vpop.f32.mrf.mxu0
  %343 = vmatprep.mubr.f32.mxu0 0.0
  %344 = vmatmul.mubr.f32.gmra.mxu0 %v86
  %v345 = vpop.f32.mrf.mxu0
  %v346 = vadd.f32 0.0, %v345
  %v347 = vpop.f32.mrf.mxu0
  %348 = vmatprep.mubr.f32.mxu0 0.0
  %349 = vmatmul.mubr.f32.gmra.mxu0 %v87
  %v350 = vpop.f32.mrf.mxu0
  %v351 = vadd.f32 0.0, %v350
  %v352 = vpop.f32.mrf.mxu0
  %353 = vdwg.mxu0
  %v354 = vld [vmem:[%s1] sm:$0xff]
  %355 = vset.pattern.permute.xlu0 0
  %356 = vperm.xlu0 %355, %v354
  %v357 = vpop.permute.xlu0 %356
  %vm358 = vcmp.eq.s32.totalorder %v357, %v39
  %v359 = vsel %vm358, 1, 0
  %v360 = vcvt.s32.f32 %v359
  %v361 = vld [vmem:[%s3] sm:$0xff]
  %v362 = vld [vmem:[%s3 + $0x8] sm:$0xff]
  %v363 = vld [vmem:[%s3 + $0x10] sm:$0xff]
  %v364 = vld [vmem:[%s3 + $0x18] sm:$0xff]
  %v365 = vld [vmem:[%s3 + $0x20] sm:$0xff]
  %v366 = vld [vmem:[%s3 + $0x28] sm:$0xff]
  %v367 = vld [vmem:[%s3 + $0x30] sm:$0xff]
  %v368 = vld [vmem:[%s3 + $0x38] sm:$0xff]
  %v369 = vld [vmem:[%s3 + $0x40] sm:$0xff]
  %v370 = vld [vmem:[%s3 + $0x48] sm:$0xff]
  %v371 = vld [vmem:[%s3 + $0x50] sm:$0xff]
  %v372 = vld [vmem:[%s3 + $0x58] sm:$0xff]
  %v373 = vld [vmem:[%s3 + $0x60] sm:$0xff]
  %v374 = vld [vmem:[%s3 + $0x68] sm:$0xff]
  %v375 = vld [vmem:[%s3 + $0x70] sm:$0xff]
  %v376 = vld [vmem:[%s3 + $0x78] sm:$0xff]
  %377 = vmatprep.subr.mxu0 0.0
  %378 = vmatpush1.msra.mxu0 %v376
  %379 = vmatprep.subr.mxu0 0.0
  %380 = vmatpush1.msra.mxu0 %v375
  %381 = vmatprep.subr.mxu0 0.0
  %382 = vmatpush1.msra.mxu0 %v374
  %383 = vmatprep.subr.mxu0 0.0
  %384 = vmatpush1.msra.mxu0 %v373
  %385 = vmatprep.subr.mxu0 0.0
  %386 = vmatpush1.msra.mxu0 %v372
  %387 = vmatprep.subr.mxu0 0.0
  %388 = vmatpush1.msra.mxu0 %v371
  %389 = vmatprep.subr.mxu0 0.0
  %390 = vmatpush1.msra.mxu0 %v370
  %391 = vmatprep.subr.mxu0 0.0
  %392 = vmatpush1.msra.mxu0 %v369
  %393 = vmatprep.subr.mxu0 0.0
  %394 = vmatpush1.msra.mxu0 %v368
  %395 = vmatprep.subr.mxu0 0.0
  %396 = vmatpush1.msra.mxu0 %v367
  %397 = vmatprep.subr.mxu0 0.0
  %398 = vmatpush1.msra.mxu0 %v366
  %399 = vmatprep.subr.mxu0 0.0
  %400 = vmatpush1.msra.mxu0 %v365
  %401 = vmatprep.subr.mxu0 0.0
  %402 = vmatpush1.msra.mxu0 %v364
  %403 = vmatprep.subr.mxu0 0.0
  %404 = vmatpush1.msra.mxu0 %v363
  %405 = vmatprep.subr.mxu0 0.0
  %406 = vmatpush1.msra.mxu0 %v362
  %407 = vmatprep.subr.mxu0 0.0
  %408 = vmatpush1.msra.mxu0 %v361
  %409 = vmatprep.subr.mxu0 0.0
  %410 = vmatpush2.msra.mxu0 0.0
  %411 = vmatprep.subr.mxu0 0.0
  %412 = vmatpush2.msra.mxu0 0.0
  %413 = vmatprep.subr.mxu0 0.0
  %414 = vmatpush2.msra.mxu0 0.0
  %415 = vmatprep.subr.mxu0 0.0
  %416 = vmatpush2.msra.mxu0 0.0
  %417 = vmatprep.subr.mxu0 0.0
  %418 = vmatpush2.msra.mxu0 0.0
  %419 = vmatprep.subr.mxu0 0.0
  %420 = vmatpush2.msra.mxu0 0.0
  %421 = vmatprep.subr.mxu0 0.0
  %422 = vmatpush2.msra.mxu0 0.0
  %423 = vmatprep.subr.mxu0 0.0
  %424 = vmatpush2.msra.mxu0 0.0
  %425 = vmatprep.subr.mxu0 0.0
  %426 = vmatpush2.msra.mxu0 0.0
  %427 = vmatprep.subr.mxu0 0.0
  %428 = vmatpush2.msra.mxu0 0.0
  %429 = vmatprep.subr.mxu0 0.0
  %430 = vmatpush2.msra.mxu0 0.0
  %431 = vmatprep.subr.mxu0 0.0
  %432 = vmatpush2.msra.mxu0 0.0
  %433 = vmatprep.subr.mxu0 0.0
  %434 = vmatpush2.msra.mxu0 0.0
  %435 = vmatprep.subr.mxu0 0.0
  %436 = vmatpush2.msra.mxu0 0.0
  %437 = vmatprep.subr.mxu0 0.0
  %438 = vmatpush2.msra.mxu0 0.0
  %439 = vmatprep.subr.mxu0 0.0
  %440 = vmatpush2.msra.mxu0 0.0
  %441 = vmatprep.mubr.f32.mxu0 0.0
  %442 = vmatmul.mubr.f32.gmra.mxu0 %v360
  %v443 = vpop.f32.mrf.mxu0
  %v444 = vadd.f32 0.0, %v443
  %v445 = vpop.f32.mrf.mxu0
  %446 = vdwg.mxu0
  %v447 = vld [vmem:[%s4] sm:$0xff]
  %v448 = vld [vmem:[%s4 + $0x8] sm:$0xf]
  %v449 = vld [vmem:[%s4 + $0xc] sm:$0xff]
  %v450 = vld [vmem:[%s4 + $0x14] sm:$0xf]
  %v451 = vld [vmem:[%s4 + $0x18] sm:$0xff]
  %v452 = vld [vmem:[%s4 + $0x20] sm:$0xf]
  %v453 = vld [vmem:[%s4 + $0x24] sm:$0xff]
  %v454 = vld [vmem:[%s4 + $0x2c] sm:$0xf]
  %v455 = vld [vmem:[%s4 + $0x30] sm:$0xff]
  %v456 = vld [vmem:[%s4 + $0x38] sm:$0xf]
  %v457 = vld [vmem:[%s4 + $0x3c] sm:$0xff]
  %v458 = vld [vmem:[%s4 + $0x44] sm:$0xf]
  %v459 = vld [vmem:[%s4 + $0x48] sm:$0xff]
  %v460 = vld [vmem:[%s4 + $0x50] sm:$0xf]
  %v461 = vld [vmem:[%s4 + $0x54] sm:$0xff]
  %v462 = vld [vmem:[%s4 + $0x5c] sm:$0xf]
  %v463 = vld [vmem:[%s4 + $0x60] sm:$0xff]
  %v464 = vld [vmem:[%s4 + $0x68] sm:$0xf]
  %v465 = vld [vmem:[%s4 + $0x6c] sm:$0xff]
  %v466 = vld [vmem:[%s4 + $0x74] sm:$0xf]
  %v467 = vld [vmem:[%s4 + $0x78] sm:$0xff]
  %v468 = vld [vmem:[%s4 + $0x80] sm:$0xf]
  %v469 = vld [vmem:[%s4 + $0x84] sm:$0xff]
  %v470 = vld [vmem:[%s4 + $0x8c] sm:$0xf]
  %v471 = vld [vmem:[%s4 + $0x90] sm:$0xff]
  %v472 = vld [vmem:[%s4 + $0x98] sm:$0xf]
  %v473 = vld [vmem:[%s4 + $0x9c] sm:$0xff]
  %v474 = vld [vmem:[%s4 + $0xa4] sm:$0xf]
  %v475 = vld [vmem:[%s4 + $0xa8] sm:$0xff]
  %v476 = vld [vmem:[%s4 + $0xb0] sm:$0xf]
  %v477 = vld [vmem:[%s4 + $0xb4] sm:$0xff]
  %v478 = vld [vmem:[%s4 + $0xbc] sm:$0xf]
  %v479 = vld [vmem:[%s5] sm:$0x1]
  %v481 = vlaneseq
  %v482 = vshrl.u32 %v481, 7
  %v483 = vsub.s32 0, %v482
  %v484 = vrot.slane %v479, %v483
  %v486 = vpack.c.bf16 %v444, %v444
  %v519 = vunpack.c.l.b16 %v447
  %v520 = vunpack.c.h.b16 %v447
  %v521 = vunpack.c.l.b16 %v448
  %v522 = vunpack.c.l.b16 %v449
  %v523 = vunpack.c.h.b16 %v449
  %v524 = vunpack.c.l.b16 %v450
  %v525 = vunpack.c.l.b16 %v451
  %v526 = vunpack.c.h.b16 %v451
  %v527 = vunpack.c.l.b16 %v452
  %v528 = vunpack.c.l.b16 %v453
  %v529 = vunpack.c.h.b16 %v453
  %v530 = vunpack.c.l.b16 %v454
  %v531 = vunpack.c.l.b16 %v455
  %v532 = vunpack.c.h.b16 %v455
  %v533 = vunpack.c.l.b16 %v456
  %v534 = vunpack.c.l.b16 %v457
  %v535 = vunpack.c.h.b16 %v457
  %v536 = vunpack.c.l.b16 %v458
  %v537 = vunpack.c.l.b16 %v459
  %v538 = vunpack.c.h.b16 %v459
  %v539 = vunpack.c.l.b16 %v460
  %v540 = vunpack.c.l.b16 %v461
  %v541 = vunpack.c.h.b16 %v461
  %v542 = vunpack.c.l.b16 %v462
  %v543 = vunpack.c.l.b16 %v463
  %v544 = vunpack.c.h.b16 %v463
  %v545 = vunpack.c.l.b16 %v464
  %v546 = vunpack.c.l.b16 %v465
  %v547 = vunpack.c.h.b16 %v465
  %v548 = vunpack.c.l.b16 %v466
  %v549 = vunpack.c.l.b16 %v467
  %v550 = vunpack.c.h.b16 %v467
  %v551 = vunpack.c.l.b16 %v468
  %v552 = vunpack.c.l.b16 %v469
  %v553 = vunpack.c.h.b16 %v469
  %v554 = vunpack.c.l.b16 %v470
  %v555 = vunpack.c.l.b16 %v471
  %v556 = vunpack.c.h.b16 %v471
  %v557 = vunpack.c.l.b16 %v472
  %v558 = vunpack.c.l.b16 %v473
  %v559 = vunpack.c.h.b16 %v473
  %v560 = vunpack.c.l.b16 %v474
  %v561 = vunpack.c.l.b16 %v475
  %v562 = vunpack.c.h.b16 %v475
  %v563 = vunpack.c.l.b16 %v476
  %v564 = vunpack.c.l.b16 %v477
  %v565 = vunpack.c.h.b16 %v477
  %v566 = vunpack.c.l.b16 %v478
  %v567 = vpack.c.b16 %v522, %v519
  %v568 = vpack.c.b16 %v523, %v520
  %v569 = vpack.c.b16 %v524, %v521
  %v570 = vpack.c.b16 %v528, %v525
  %v571 = vpack.c.b16 %v529, %v526
  %v572 = vpack.c.b16 %v530, %v527
  %v573 = vpack.c.b16 %v534, %v531
  %v574 = vpack.c.b16 %v535, %v532
  %v575 = vpack.c.b16 %v536, %v533
  %v576 = vpack.c.b16 %v540, %v537
  %v577 = vpack.c.b16 %v541, %v538
  %v578 = vpack.c.b16 %v542, %v539
  %v579 = vpack.c.b16 %v546, %v543
  %v580 = vpack.c.b16 %v547, %v544
  %v581 = vpack.c.b16 %v548, %v545
  %v582 = vpack.c.b16 %v552, %v549
  %v583 = vpack.c.b16 %v553, %v550
  %v584 = vpack.c.b16 %v554, %v551
  %v585 = vpack.c.b16 %v558, %v555
  %v586 = vpack.c.b16 %v559, %v556
  %v587 = vpack.c.b16 %v560, %v557
  %v588 = vpack.c.b16 %v564, %v561
  %v589 = vpack.c.b16 %v565, %v562
  %v590 = vpack.c.b16 %v566, %v563
  %615 = vmatprep.subr.bf16.mxu0 %v589
  %616 = vmatpush1.bf16.msra.mxu0 %v588
  %617 = vmatprep.subr.bf16.mxu0 %v586
  %618 = vmatpush1.bf16.msra.mxu0 %v585
  %619 = vmatprep.subr.bf16.mxu0 %v583
  %620 = vmatpush1.bf16.msra.mxu0 %v582
  %621 = vmatprep.subr.bf16.mxu0 %v580
  %622 = vmatpush1.bf16.msra.mxu0 %v579
  %623 = vmatprep.subr.bf16.mxu0 %v577
  %624 = vmatpush1.bf16.msra.mxu0 %v576
  %625 = vmatprep.subr.bf16.mxu0 %v574
  %626 = vmatpush1.bf16.msra.mxu0 %v573
  %627 = vmatprep.subr.bf16.mxu0 %v571
  %628 = vmatpush1.bf16.msra.mxu0 %v570
  %629 = vmatprep.subr.bf16.mxu0 %v568
  %630 = vmatpush1.bf16.msra.mxu0 %v567
  %631 = vmatprep.subr.bf16.mxu0 0
  %632 = vmatpush2.bf16.msra.mxu0 0
  %633 = vmatprep.subr.bf16.mxu0 0
  %634 = vmatpush2.bf16.msra.mxu0 0
  %635 = vmatprep.subr.bf16.mxu0 0
  %636 = vmatpush2.bf16.msra.mxu0 0
  %637 = vmatprep.subr.bf16.mxu0 0
  %638 = vmatpush2.bf16.msra.mxu0 0
  %639 = vmatprep.subr.bf16.mxu0 0
  %640 = vmatpush2.bf16.msra.mxu0 0
  %641 = vmatprep.subr.bf16.mxu0 0
  %642 = vmatpush2.bf16.msra.mxu0 0
  %643 = vmatprep.subr.bf16.mxu0 0
  %644 = vmatpush2.bf16.msra.mxu0 0
  %645 = vmatprep.subr.bf16.mxu0 0
  %646 = vmatpush2.bf16.msra.mxu0 0
  %647 = vmatprep.mubr.bf16.mxu0 0
  %648 = vmatmul.mubr.bf16.gmra.mxu0 %v486
  %v649 = vpop.f32.mrf.mxu0
  %v650 = vadd.f32 0.0, %v649
  %v651 = vpop.f32.mrf.mxu0
  %v652 = vadd.f32 0.0, %v651
  %v653 = vpop.f32.mrf.mxu0
  %v654 = vpop.f32.mrf.mxu0
  %655 = vdwg.mxu0
  %656 = vmatprep.subr.bf16.mxu0 0
  %657 = vmatpush1.bf16.msra.mxu0 %v590
  %658 = vmatprep.subr.bf16.mxu0 0
  %659 = vmatpush1.bf16.msra.mxu0 %v587
  %660 = vmatprep.subr.bf16.mxu0 0
  %661 = vmatpush1.bf16.msra.mxu0 %v584
  %662 = vmatprep.subr.bf16.mxu0 0
  %663 = vmatpush1.bf16.msra.mxu0 %v581
  %664 = vmatprep.subr.bf16.mxu0 0
  %665 = vmatpush1.bf16.msra.mxu0 %v578
  %666 = vmatprep.subr.bf16.mxu0 0
  %667 = vmatpush1.bf16.msra.mxu0 %v575
  %668 = vmatprep.subr.bf16.mxu0 0
  %669 = vmatpush1.bf16.msra.mxu0 %v572
  %670 = vmatprep.subr.bf16.mxu0 0
  %671 = vmatpush1.bf16.msra.mxu0 %v569
  %672 = vmatprep.subr.bf16.mxu0 0
  %673 = vmatpush2.bf16.msra.mxu0 0
  %674 = vmatprep.subr.bf16.mxu0 0
  %675 = vmatpush2.bf16.msra.mxu0 0
  %676 = vmatprep.subr.bf16.mxu0 0
  %677 = vmatpush2.bf16.msra.mxu0 0
  %678 = vmatprep.subr.bf16.mxu0 0
  %679 = vmatpush2.bf16.msra.mxu0 0
  %680 = vmatprep.subr.bf16.mxu0 0
  %681 = vmatpush2.bf16.msra.mxu0 0
  %682 = vmatprep.subr.bf16.mxu0 0
  %683 = vmatpush2.bf16.msra.mxu0 0
  %684 = vmatprep.subr.bf16.mxu0 0
  %685 = vmatpush2.bf16.msra.mxu0 0
  %686 = vmatprep.subr.bf16.mxu0 0
  %687 = vmatpush2.bf16.msra.mxu0 0
  %688 = vmatprep.mubr.bf16.mxu0 0
  %689 = vmatmul.mubr.bf16.gmra.mxu0 %v486
  %v690 = vpop.f32.mrf.mxu0
  %v691 = vadd.f32 0.0, %v690
  %v692 = vpop.f32.mrf.mxu0
  %v693 = vpop.f32.mrf.mxu0
  %v694 = vpop.f32.mrf.mxu0
  %695 = vdwg.mxu0
  %v696 = vadd.f32 %v203, %v650
  %v697 = vadd.f32 %v205, %v652
  %v698 = vxor.u32 %v696, 2147483648
  %v699 = vxor.u32 %v697, 2147483648
  %v700 = vmul.f32 %v698, 1.442695
  %v701 = vpow.pop %v700
  %v702 = vmul.f32 %v699, 1.442695
  %v703 = vpow.pop %v702
  %v704 = vadd.f32 %v701, 1.0
  %v705 = vadd.f32 %v703, 1.0
  %v706 = vrcp.pop %v704
  %v707 = vmul.f32 1.0, %v706
  %v708 = vrcp.pop %v705
  %v709 = vmul.f32 1.0, %v708
  %v710 = vadd.f32 %v691, %v484
  %v711 = vmul.f32 %v707, %v710
  %v712 = vadd.f32 %v316, %v711
  %v713 = vtanh.pop %v712
  %v714 = vsub.f32 %v444, %v713
  %v715 = vmul.f32 %v709, %v714
  %v716 = vadd.f32 %v713, %v715
  %717 = vst [vmem:[#allocation2] sm:$0xff] %v716
  %v718 = vpack.c.bf16 %v716, %v716
  %719 = vmatprep.subr.bf16.mxu0 %v589
  %720 = vmatpush1.bf16.msra.mxu0 %v588
  %721 = vmatprep.subr.bf16.mxu0 %v586
  %722 = vmatpush1.bf16.msra.mxu0 %v585
  %723 = vmatprep.subr.bf16.mxu0 %v583
  %724 = vmatpush1.bf16.msra.mxu0 %v582
  %725 = vmatprep.subr.bf16.mxu0 %v580
  %726 = vmatpush1.bf16.msra.mxu0 %v579
  %727 = vmatprep.subr.bf16.mxu0 %v577
  %728 = vmatpush1.bf16.msra.mxu0 %v576
  %729 = vmatprep.subr.bf16.mxu0 %v574
  %730 = vmatpush1.bf16.msra.mxu0 %v573
  %731 = vmatprep.subr.bf16.mxu0 %v571
  %732 = vmatpush1.bf16.msra.mxu0 %v570
  %733 = vmatprep.subr.bf16.mxu0 %v568
  %734 = vmatpush1.bf16.msra.mxu0 %v567
  %735 = vmatprep.subr.bf16.mxu0 0
  %736 = vmatpush2.bf16.msra.mxu0 0
  %737 = vmatprep.subr.bf16.mxu0 0
  %738 = vmatpush2.bf16.msra.mxu0 0
  %739 = vmatprep.subr.bf16.mxu0 0
  %740 = vmatpush2.bf16.msra.mxu0 0
  %741 = vmatprep.subr.bf16.mxu0 0
  %742 = vmatpush2.bf16.msra.mxu0 0
  %743 = vmatprep.subr.bf16.mxu0 0
  %744 = vmatpush2.bf16.msra.mxu0 0
  %745 = vmatprep.subr.bf16.mxu0 0
  %746 = vmatpush2.bf16.msra.mxu0 0
  %747 = vmatprep.subr.bf16.mxu0 0
  %748 = vmatpush2.bf16.msra.mxu0 0
  %749 = vmatprep.subr.bf16.mxu0 0
  %750 = vmatpush2.bf16.msra.mxu0 0
  %751 = vmatprep.mubr.bf16.mxu0 0
  %752 = vmatmul.mubr.bf16.gmra.mxu0 %v718
  %v753 = vpop.f32.mrf.mxu0
  %v754 = vadd.f32 0.0, %v753
  %v755 = vpop.f32.mrf.mxu0
  %v756 = vadd.f32 0.0, %v755
  %v757 = vpop.f32.mrf.mxu0
  %v758 = vpop.f32.mrf.mxu0
  %759 = vdwg.mxu0
  %760 = vmatprep.subr.bf16.mxu0 0
  %761 = vmatpush1.bf16.msra.mxu0 %v590
  %762 = vmatprep.subr.bf16.mxu0 0
  %763 = vmatpush1.bf16.msra.mxu0 %v587
  %764 = vmatprep.subr.bf16.mxu0 0
  %765 = vmatpush1.bf16.msra.mxu0 %v584
  %766 = vmatprep.subr.bf16.mxu0 0
  %767 = vmatpush1.bf16.msra.mxu0 %v581
  %768 = vmatprep.subr.bf16.mxu0 0
  %769 = vmatpush1.bf16.msra.mxu0 %v578
  %770 = vmatprep.subr.bf16.mxu0 0
  %771 = vmatpush1.bf16.msra.mxu0 %v575
  %772 = vmatprep.subr.bf16.mxu0 0
  %773 = vmatpush1.bf16.msra.mxu0 %v572
  %774 = vmatprep.subr.bf16.mxu0 0
  %775 = vmatpush1.bf16.msra.mxu0 %v569
  %776 = vmatprep.subr.bf16.mxu0 0
  %777 = vmatpush2.bf16.msra.mxu0 0
  %778 = vmatprep.subr.bf16.mxu0 0
  %779 = vmatpush2.bf16.msra.mxu0 0
  %780 = vmatprep.subr.bf16.mxu0 0
  %781 = vmatpush2.bf16.msra.mxu0 0
  %782 = vmatprep.subr.bf16.mxu0 0
  %783 = vmatpush2.bf16.msra.mxu0 0
  %784 = vmatprep.subr.bf16.mxu0 0
  %785 = vmatpush2.bf16.msra.mxu0 0
  %786 = vmatprep.subr.bf16.mxu0 0
  %787 = vmatpush2.bf16.msra.mxu0 0
  %788 = vmatprep.subr.bf16.mxu0 0
  %789 = vmatpush2.bf16.msra.mxu0 0
  %790 = vmatprep.subr.bf16.mxu0 0
  %791 = vmatpush2.bf16.msra.mxu0 0
  %792 = vmatprep.mubr.bf16.mxu0 0
  %793 = vmatmul.mubr.bf16.gmra.mxu0 %v718
  %v794 = vpop.f32.mrf.mxu0
  %v795 = vadd.f32 0.0, %v794
  %v796 = vpop.f32.mrf.mxu0
  %v797 = vpop.f32.mrf.mxu0
  %v798 = vpop.f32.mrf.mxu0
  %799 = vdwg.mxu0
  %v800 = vadd.f32 %v209, %v754
  %v801 = vadd.f32 %v211, %v756
  %v802 = vxor.u32 %v800, 2147483648
  %v803 = vxor.u32 %v801, 2147483648
  %v804 = vmul.f32 %v802, 1.442695
  %v805 = vpow.pop %v804
  %v806 = vmul.f32 %v803, 1.442695
  %v807 = vpow.pop %v806
  %v808 = vadd.f32 %v805, 1.0
  %v809 = vadd.f32 %v807, 1.0
  %v810 = vrcp.pop %v808
  %v811 = vmul.f32 1.0, %v810
  %v812 = vrcp.pop %v809
  %v813 = vmul.f32 1.0, %v812
  %v814 = vadd.f32 %v795, %v484
  %v815 = vmul.f32 %v811, %v814
  %v816 = vadd.f32 %v321, %v815
  %v817 = vtanh.pop %v816
  %v818 = vsub.f32 %v716, %v817
  %v819 = vmul.f32 %v813, %v818
  %v820 = vadd.f32 %v817, %v819
  %821 = vst [vmem:[#allocation2 + $0x8] sm:$0xff] %v820
  %v822 = vpack.c.bf16 %v820, %v820
  %823 = vmatprep.subr.bf16.mxu0 %v589
  %824 = vmatpush1.bf16.msra.mxu0 %v588
  %825 = vmatprep.subr.bf16.mxu0 %v586
  %826 = vmatpush1.bf16.msra.mxu0 %v585
  %827 = vmatprep.subr.bf16.mxu0 %v583
  %828 = vmatpush1.bf16.msra.mxu0 %v582
  %829 = vmatprep.subr.bf16.mxu0 %v580
  %830 = vmatpush1.bf16.msra.mxu0 %v579
  %831 = vmatprep.subr.bf16.mxu0 %v577
  %832 = vmatpush1.bf16.msra.mxu0 %v576
  %833 = vmatprep.subr.bf16.mxu0 %v574
  %834 = vmatpush1.bf16.msra.mxu0 %v573
  %835 = vmatprep.subr.bf16.mxu0 %v571
  %836 = vmatpush1.bf16.msra.mxu0 %v570
  %837 = vmatprep.subr.bf16.mxu0 %v568
  %838 = vmatpush1.bf16.msra.mxu0 %v567
  %839 = vmatprep.subr.bf16.mxu0 0
  %840 = vmatpush2.bf16.msra.mxu0 0
  %841 = vmatprep.subr.bf16.mxu0 0
  %842 = vmatpush2.bf16.msra.mxu0 0
  %843 = vmatprep.subr.bf16.mxu0 0
  %844 = vmatpush2.bf16.msra.mxu0 0
  %845 = vmatprep.subr.bf16.mxu0 0
  %846 = vmatpush2.bf16.msra.mxu0 0
  %847 = vmatprep.subr.bf16.mxu0 0
  %848 = vmatpush2.bf16.msra.mxu0 0
  %849 = vmatprep.subr.bf16.mxu0 0
  %850 = vmatpush2.bf16.msra.mxu0 0
  %851 = vmatprep.subr.bf16.mxu0 0
  %852 = vmatpush2.bf16.msra.mxu0 0
  %853 = vmatprep.subr.bf16.mxu0 0
  %854 = vmatpush2.bf16.msra.mxu0 0
  %855 = vmatprep.mubr.bf16.mxu0 0
  %856 = vmatmul.mubr.bf16.gmra.mxu0 %v822
  %v857 = vpop.f32.mrf.mxu0
  %v858 = vadd.f32 0.0, %v857
  %v859 = vpop.f32.mrf.mxu0
  %v860 = vadd.f32 0.0, %v859
  %v861 = vpop.f32.mrf.mxu0
  %v862 = vpop.f32.mrf.mxu0
  %863 = vdwg.mxu0
  %864 = vmatprep.subr.bf16.mxu0 0
  %865 = vmatpush1.bf16.msra.mxu0 %v590
  %866 = vmatprep.subr.bf16.mxu0 0
  %867 = vmatpush1.bf16.msra.mxu0 %v587
  %868 = vmatprep.subr.bf16.mxu0 0
  %869 = vmatpush1.bf16.msra.mxu0 %v584
  %870 = vmatprep.subr.bf16.mxu0 0
  %871 = vmatpush1.bf16.msra.mxu0 %v581
  %872 = vmatprep.subr.bf16.mxu0 0
  %873 = vmatpush1.bf16.msra.mxu0 %v578
  %874 = vmatprep.subr.bf16.mxu0 0
  %875 = vmatpush1.bf16.msra.mxu0 %v575
  %876 = vmatprep.subr.bf16.mxu0 0
  %877 = vmatpush1.bf16.msra.mxu0 %v572
  %878 = vmatprep.subr.bf16.mxu0 0
  %879 = vmatpush1.bf16.msra.mxu0 %v569
  %880 = vmatprep.subr.bf16.mxu0 0
  %881 = vmatpush2.bf16.msra.mxu0 0
  %882 = vmatprep.subr.bf16.mxu0 0
  %883 = vmatpush2.bf16.msra.mxu0 0
  %884 = vmatprep.subr.bf16.mxu0 0
  %885 = vmatpush2.bf16.msra.mxu0 0
  %886 = vmatprep.subr.bf16.mxu0 0
  %887 = vmatpush2.bf16.msra.mxu0 0
  %888 = vmatprep.subr.bf16.mxu0 0
  %889 = vmatpush2.bf16.msra.mxu0 0
  %890 = vmatprep.subr.bf16.mxu0 0
  %891 = vmatpush2.bf16.msra.mxu0 0
  %892 = vmatprep.subr.bf16.mxu0 0
  %893 = vmatpush2.bf16.msra.mxu0 0
  %894 = vmatprep.subr.bf16.mxu0 0
  %895 = vmatpush2.bf16.msra.mxu0 0
  %896 = vmatprep.mubr.bf16.mxu0 0
  %897 = vmatmul.mubr.bf16.gmra.mxu0 %v822
  %v898 = vpop.f32.mrf.mxu0
  %v899 = vadd.f32 0.0, %v898
  %v900 = vpop.f32.mrf.mxu0
  %v901 = vpop.f32.mrf.mxu0
  %v902 = vpop.f32.mrf.mxu0
  %903 = vdwg.mxu0
  %v904 = vadd.f32 %v215, %v858
  %v905 = vadd.f32 %v217, %v860
  %v906 = vxor.u32 %v904, 2147483648
  %v907 = vxor.u32 %v905, 2147483648
  %v908 = vmul.f32 %v906, 1.442695
  %v909 = vpow.pop %v908
  %v910 = vmul.f32 %v907, 1.442695
  %v911 = vpow.pop %v910
  %v912 = vadd.f32 %v909, 1.0
  %v913 = vadd.f32 %v911, 1.0
  %v914 = vrcp.pop %v912
  %v915 = vmul.f32 1.0, %v914
  %v916 = vrcp.pop %v913
  %v917 = vmul.f32 1.0, %v916
  %v918 = vadd.f32 %v899, %v484
  %v919 = vmul.f32 %v915, %v918
  %v920 = vadd.f32 %v326, %v919
  %v921 = vtanh.pop %v920
  %v922 = vsub.f32 %v820, %v921
  %v923 = vmul.f32 %v917, %v922
  %v924 = vadd.f32 %v921, %v923
  %925 = vst [vmem:[#allocation2 + $0x10] sm:$0xff] %v924
  %v926 = vpack.c.bf16 %v924, %v924
  %927 = vmatprep.subr.bf16.mxu0 %v589
  %928 = vmatpush1.bf16.msra.mxu0 %v588
  %929 = vmatprep.subr.bf16.mxu0 %v586
  %930 = vmatpush1.bf16.msra.mxu0 %v585
  %931 = vmatprep.subr.bf16.mxu0 %v583
  %932 = vmatpush1.bf16.msra.mxu0 %v582
  %933 = vmatprep.subr.bf16.mxu0 %v580
  %934 = vmatpush1.bf16.msra.mxu0 %v579
  %935 = vmatprep.subr.bf16.mxu0 %v577
  %936 = vmatpush1.bf16.msra.mxu0 %v576
  %937 = vmatprep.subr.bf16.mxu0 %v574
  %938 = vmatpush1.bf16.msra.mxu0 %v573
  %939 = vmatprep.subr.bf16.mxu0 %v571
  %940 = vmatpush1.bf16.msra.mxu0 %v570
  %941 = vmatprep.subr.bf16.mxu0 %v568
  %942 = vmatpush1.bf16.msra.mxu0 %v567
  %943 = vmatprep.subr.bf16.mxu0 0
  %944 = vmatpush2.bf16.msra.mxu0 0
  %945 = vmatprep.subr.bf16.mxu0 0
  %946 = vmatpush2.bf16.msra.mxu0 0
  %947 = vmatprep.subr.bf16.mxu0 0
  %948 = vmatpush2.bf16.msra.mxu0 0
  %949 = vmatprep.subr.bf16.mxu0 0
  %950 = vmatpush2.bf16.msra.mxu0 0
  %951 = vmatprep.subr.bf16.mxu0 0
  %952 = vmatpush2.bf16.msra.mxu0 0
  %953 = vmatprep.subr.bf16.mxu0 0
  %954 = vmatpush2.bf16.msra.mxu0 0
  %955 = vmatprep.subr.bf16.mxu0 0
  %956 = vmatpush2.bf16.msra.mxu0 0
  %957 = vmatprep.subr.bf16.mxu0 0
  %958 = vmatpush2.bf16.msra.mxu0 0
  %959 = vmatprep.mubr.bf16.mxu0 0
  %960 = vmatmul.mubr.bf16.gmra.mxu0 %v926
  %v961 = vpop.f32.mrf.mxu0
  %v962 = vadd.f32 0.0, %v961
  %v963 = vpop.f32.mrf.mxu0
  %v964 = vadd.f32 0.0, %v963
  %v965 = vpop.f32.mrf.mxu0
  %v966 = vpop.f32.mrf.mxu0
  %967 = vdwg.mxu0
  %968 = vmatprep.subr.bf16.mxu0 0
  %969 = vmatpush1.bf16.msra.mxu0 %v590
  %970 = vmatprep.subr.bf16.mxu0 0
  %971 = vmatpush1.bf16.msra.mxu0 %v587
  %972 = vmatprep.subr.bf16.mxu0 0
  %973 = vmatpush1.bf16.msra.mxu0 %v584
  %974 = vmatprep.subr.bf16.mxu0 0
  %975 = vmatpush1.bf16.msra.mxu0 %v581
  %976 = vmatprep.subr.bf16.mxu0 0
  %977 = vmatpush1.bf16.msra.mxu0 %v578
  %978 = vmatprep.subr.bf16.mxu0 0
  %979 = vmatpush1.bf16.msra.mxu0 %v575
  %980 = vmatprep.subr.bf16.mxu0 0
  %981 = vmatpush1.bf16.msra.mxu0 %v572
  %982 = vmatprep.subr.bf16.mxu0 0
  %983 = vmatpush1.bf16.msra.mxu0 %v569
  %984 = vmatprep.subr.bf16.mxu0 0
  %985 = vmatpush2.bf16.msra.mxu0 0
  %986 = vmatprep.subr.bf16.mxu0 0
  %987 = vmatpush2.bf16.msra.mxu0 0
  %988 = vmatprep.subr.bf16.mxu0 0
  %989 = vmatpush2.bf16.msra.mxu0 0
  %990 = vmatprep.subr.bf16.mxu0 0
  %991 = vmatpush2.bf16.msra.mxu0 0
  %992 = vmatprep.subr.bf16.mxu0 0
  %993 = vmatpush2.bf16.msra.mxu0 0
  %994 = vmatprep.subr.bf16.mxu0 0
  %995 = vmatpush2.bf16.msra.mxu0 0
  %996 = vmatprep.subr.bf16.mxu0 0
  %997 = vmatpush2.bf16.msra.mxu0 0
  %998 = vmatprep.subr.bf16.mxu0 0
  %999 = vmatpush2.bf16.msra.mxu0 0
  %1000 = vmatprep.mubr.bf16.mxu0 0
  %1001 = vmatmul.mubr.bf16.gmra.mxu0 %v926
  %v1002 = vpop.f32.mrf.mxu0
  %v1003 = vadd.f32 0.0, %v1002
  %v1004 = vpop.f32.mrf.mxu0
  %v1005 = vpop.f32.mrf.mxu0
  %v1006 = vpop.f32.mrf.mxu0
  %1007 = vdwg.mxu0
  %v1008 = vadd.f32 %v221, %v962
  %v1009 = vadd.f32 %v223, %v964
  %v1010 = vxor.u32 %v1008, 2147483648
  %v1011 = vxor.u32 %v1009, 2147483648
  %v1012 = vmul.f32 %v1010, 1.442695
  %v1013 = vpow.pop %v1012
  %v1014 = vmul.f32 %v1011, 1.442695
  %v1015 = vpow.pop %v1014
  %v1016 = vadd.f32 %v1013, 1.0
  %v1017 = vadd.f32 %v1015, 1.0
  %v1018 = vrcp.pop %v1016
  %v1019 = vmul.f32 1.0, %v1018
  %v1020 = vrcp.pop %v1017
  %v1021 = vmul.f32 1.0, %v1020
  %v1022 = vadd.f32 %v1003, %v484
  %v1023 = vmul.f32 %v1019, %v1022
  %v1024 = vadd.f32 %v331, %v1023
  %v1025 = vtanh.pop %v1024
  %v1026 = vsub.f32 %v924, %v1025
  %v1027 = vmul.f32 %v1021, %v1026
  %v1028 = vadd.f32 %v1025, %v1027
  %1029 = vst [vmem:[#allocation2 + $0x18] sm:$0xff] %v1028
  %v1030 = vpack.c.bf16 %v1028, %v1028
  %1031 = vmatprep.subr.bf16.mxu0 %v589
  %1032 = vmatpush1.bf16.msra.mxu0 %v588
  %1033 = vmatprep.subr.bf16.mxu0 %v586
  %1034 = vmatpush1.bf16.msra.mxu0 %v585
  %1035 = vmatprep.subr.bf16.mxu0 %v583
  %1036 = vmatpush1.bf16.msra.mxu0 %v582
  %1037 = vmatprep.subr.bf16.mxu0 %v580
  %1038 = vmatpush1.bf16.msra.mxu0 %v579
  %1039 = vmatprep.subr.bf16.mxu0 %v577
  %1040 = vmatpush1.bf16.msra.mxu0 %v576
  %1041 = vmatprep.subr.bf16.mxu0 %v574
  %1042 = vmatpush1.bf16.msra.mxu0 %v573
  %1043 = vmatprep.subr.bf16.mxu0 %v571
  %1044 = vmatpush1.bf16.msra.mxu0 %v570
  %1045 = vmatprep.subr.bf16.mxu0 %v568
  %1046 = vmatpush1.bf16.msra.mxu0 %v567
  %1047 = vmatprep.subr.bf16.mxu0 0
  %1048 = vmatpush2.bf16.msra.mxu0 0
  %1049 = vmatprep.subr.bf16.mxu0 0
  %1050 = vmatpush2.bf16.msra.mxu0 0
  %1051 = vmatprep.subr.bf16.mxu0 0
  %1052 = vmatpush2.bf16.msra.mxu0 0
  %1053 = vmatprep.subr.bf16.mxu0 0
  %1054 = vmatpush2.bf16.msra.mxu0 0
  %1055 = vmatprep.subr.bf16.mxu0 0
  %1056 = vmatpush2.bf16.msra.mxu0 0
  %1057 = vmatprep.subr.bf16.mxu0 0
  %1058 = vmatpush2.bf16.msra.mxu0 0
  %1059 = vmatprep.subr.bf16.mxu0 0
  %1060 = vmatpush2.bf16.msra.mxu0 0
  %1061 = vmatprep.subr.bf16.mxu0 0
  %1062 = vmatpush2.bf16.msra.mxu0 0
  %1063 = vmatprep.mubr.bf16.mxu0 0
  %1064 = vmatmul.mubr.bf16.gmra.mxu0 %v1030
  %v1065 = vpop.f32.mrf.mxu0
  %v1066 = vadd.f32 0.0, %v1065
  %v1067 = vpop.f32.mrf.mxu0
  %v1068 = vadd.f32 0.0, %v1067
  %v1069 = vpop.f32.mrf.mxu0
  %v1070 = vpop.f32.mrf.mxu0
  %1071 = vdwg.mxu0
  %1072 = vmatprep.subr.bf16.mxu0 0
  %1073 = vmatpush1.bf16.msra.mxu0 %v590
  %1074 = vmatprep.subr.bf16.mxu0 0
  %1075 = vmatpush1.bf16.msra.mxu0 %v587
  %1076 = vmatprep.subr.bf16.mxu0 0
  %1077 = vmatpush1.bf16.msra.mxu0 %v584
  %1078 = vmatprep.subr.bf16.mxu0 0
  %1079 = vmatpush1.bf16.msra.mxu0 %v581
  %1080 = vmatprep.subr.bf16.mxu0 0
  %1081 = vmatpush1.bf16.msra.mxu0 %v578
  %1082 = vmatprep.subr.bf16.mxu0 0
  %1083 = vmatpush1.bf16.msra.mxu0 %v575
  %1084 = vmatprep.subr.bf16.mxu0 0
  %1085 = vmatpush1.bf16.msra.mxu0 %v572
  %1086 = vmatprep.subr.bf16.mxu0 0
  %1087 = vmatpush1.bf16.msra.mxu0 %v569
  %1088 = vmatprep.subr.bf16.mxu0 0
  %1089 = vmatpush2.bf16.msra.mxu0 0
  %1090 = vmatprep.subr.bf16.mxu0 0
  %1091 = vmatpush2.bf16.msra.mxu0 0
  %1092 = vmatprep.subr.bf16.mxu0 0
  %1093 = vmatpush2.bf16.msra.mxu0 0
  %1094 = vmatprep.subr.bf16.mxu0 0
  %1095 = vmatpush2.bf16.msra.mxu0 0
  %1096 = vmatprep.subr.bf16.mxu0 0
  %1097 = vmatpush2.bf16.msra.mxu0 0
  %1098 = vmatprep.subr.bf16.mxu0 0
  %1099 = vmatpush2.bf16.msra.mxu0 0
  %1100 = vmatprep.subr.bf16.mxu0 0
  %1101 = vmatpush2.bf16.msra.mxu0 0
  %1102 = vmatprep.subr.bf16.mxu0 0
  %1103 = vmatpush2.bf16.msra.mxu0 0
  %1104 = vmatprep.mubr.bf16.mxu0 0
  %1105 = vmatmul.mubr.bf16.gmra.mxu0 %v1030
  %v1106 = vpop.f32.mrf.mxu0
  %v1107 = vadd.f32 0.0, %v1106
  %v1108 = vpop.f32.mrf.mxu0
  %v1109 = vpop.f32.mrf.mxu0
  %v1110 = vpop.f32.mrf.mxu0
  %1111 = vdwg.mxu0
  %v1112 = vadd.f32 %v227, %v1066
  %v1113 = vadd.f32 %v229, %v1068
  %v1114 = vxor.u32 %v1112, 2147483648
  %v1115 = vxor.u32 %v1113, 2147483648
  %v1116 = vmul.f32 %v1114, 1.442695
  %v1117 = vpow.pop %v1116
  %v1118 = vmul.f32 %v1115, 1.442695
  %v1119 = vpow.pop %v1118
  %v1120 = vadd.f32 %v1117, 1.0
  %v1121 = vadd.f32 %v1119, 1.0
  %v1122 = vrcp.pop %v1120
  %v1123 = vmul.f32 1.0, %v1122
  %v1124 = vrcp.pop %v1121
  %v1125 = vmul.f32 1.0, %v1124
  %v1126 = vadd.f32 %v1107, %v484
  %v1127 = vmul.f32 %v1123, %v1126
  %v1128 = vadd.f32 %v336, %v1127
  %v1129 = vtanh.pop %v1128
  %v1130 = vsub.f32 %v1028, %v1129
  %v1131 = vmul.f32 %v1125, %v1130
  %v1132 = vadd.f32 %v1129, %v1131
  %1133 = vst [vmem:[#allocation2 + $0x20] sm:$0xff] %v1132
  %v1134 = vpack.c.bf16 %v1132, %v1132
  %1135 = vmatprep.subr.bf16.mxu0 %v589
  %1136 = vmatpush1.bf16.msra.mxu0 %v588
  %1137 = vmatprep.subr.bf16.mxu0 %v586
  %1138 = vmatpush1.bf16.msra.mxu0 %v585
  %1139 = vmatprep.subr.bf16.mxu0 %v583
  %1140 = vmatpush1.bf16.msra.mxu0 %v582
  %1141 = vmatprep.subr.bf16.mxu0 %v580
  %1142 = vmatpush1.bf16.msra.mxu0 %v579
  %1143 = vmatprep.subr.bf16.mxu0 %v577
  %1144 = vmatpush1.bf16.msra.mxu0 %v576
  %1145 = vmatprep.subr.bf16.mxu0 %v574
  %1146 = vmatpush1.bf16.msra.mxu0 %v573
  %1147 = vmatprep.subr.bf16.mxu0 %v571
  %1148 = vmatpush1.bf16.msra.mxu0 %v570
  %1149 = vmatprep.subr.bf16.mxu0 %v568
  %1150 = vmatpush1.bf16.msra.mxu0 %v567
  %1151 = vmatprep.subr.bf16.mxu0 0
  %1152 = vmatpush2.bf16.msra.mxu0 0
  %1153 = vmatprep.subr.bf16.mxu0 0
  %1154 = vmatpush2.bf16.msra.mxu0 0
  %1155 = vmatprep.subr.bf16.mxu0 0
  %1156 = vmatpush2.bf16.msra.mxu0 0
  %1157 = vmatprep.subr.bf16.mxu0 0
  %1158 = vmatpush2.bf16.msra.mxu0 0
  %1159 = vmatprep.subr.bf16.mxu0 0
  %1160 = vmatpush2.bf16.msra.mxu0 0
  %1161 = vmatprep.subr.bf16.mxu0 0
  %1162 = vmatpush2.bf16.msra.mxu0 0
  %1163 = vmatprep.subr.bf16.mxu0 0
  %1164 = vmatpush2.bf16.msra.mxu0 0
  %1165 = vmatprep.subr.bf16.mxu0 0
  %1166 = vmatpush2.bf16.msra.mxu0 0
  %1167 = vmatprep.mubr.bf16.mxu0 0
  %1168 = vmatmul.mubr.bf16.gmra.mxu0 %v1134
  %v1169 = vpop.f32.mrf.mxu0
  %v1170 = vadd.f32 0.0, %v1169
  %v1171 = vpop.f32.mrf.mxu0
  %v1172 = vadd.f32 0.0, %v1171
  %v1173 = vpop.f32.mrf.mxu0
  %v1174 = vpop.f32.mrf.mxu0
  %1175 = vdwg.mxu0
  %1176 = vmatprep.subr.bf16.mxu0 0
  %1177 = vmatpush1.bf16.msra.mxu0 %v590
  %1178 = vmatprep.subr.bf16.mxu0 0
  %1179 = vmatpush1.bf16.msra.mxu0 %v587
  %1180 = vmatprep.subr.bf16.mxu0 0
  %1181 = vmatpush1.bf16.msra.mxu0 %v584
  %1182 = vmatprep.subr.bf16.mxu0 0
  %1183 = vmatpush1.bf16.msra.mxu0 %v581
  %1184 = vmatprep.subr.bf16.mxu0 0
  %1185 = vmatpush1.bf16.msra.mxu0 %v578
  %1186 = vmatprep.subr.bf16.mxu0 0
  %1187 = vmatpush1.bf16.msra.mxu0 %v575
  %1188 = vmatprep.subr.bf16.mxu0 0
  %1189 = vmatpush1.bf16.msra.mxu0 %v572
  %1190 = vmatprep.subr.bf16.mxu0 0
  %1191 = vmatpush1.bf16.msra.mxu0 %v569
  %1192 = vmatprep.subr.bf16.mxu0 0
  %1193 = vmatpush2.bf16.msra.mxu0 0
  %1194 = vmatprep.subr.bf16.mxu0 0
  %1195 = vmatpush2.bf16.msra.mxu0 0
  %1196 = vmatprep.subr.bf16.mxu0 0
  %1197 = vmatpush2.bf16.msra.mxu0 0
  %1198 = vmatprep.subr.bf16.mxu0 0
  %1199 = vmatpush2.bf16.msra.mxu0 0
  %1200 = vmatprep.subr.bf16.mxu0 0
  %1201 = vmatpush2.bf16.msra.mxu0 0
  %1202 = vmatprep.subr.bf16.mxu0 0
  %1203 = vmatpush2.bf16.msra.mxu0 0
  %1204 = vmatprep.subr.bf16.mxu0 0
  %1205 = vmatpush2.bf16.msra.mxu0 0
  %1206 = vmatprep.subr.bf16.mxu0 0
  %1207 = vmatpush2.bf16.msra.mxu0 0
  %1208 = vmatprep.mubr.bf16.mxu0 0
  %1209 = vmatmul.mubr.bf16.gmra.mxu0 %v1134
  %v1210 = vpop.f32.mrf.mxu0
  %v1211 = vadd.f32 0.0, %v1210
  %v1212 = vpop.f32.mrf.mxu0
  %v1213 = vpop.f32.mrf.mxu0
  %v1214 = vpop.f32.mrf.mxu0
  %1215 = vdwg.mxu0
  %v1216 = vadd.f32 %v233, %v1170
  %v1217 = vadd.f32 %v235, %v1172
  %v1218 = vxor.u32 %v1216, 2147483648
  %v1219 = vxor.u32 %v1217, 2147483648
  %v1220 = vmul.f32 %v1218, 1.442695
  %v1221 = vpow.pop %v1220
  %v1222 = vmul.f32 %v1219, 1.442695
  %v1223 = vpow.pop %v1222
  %v1224 = vadd.f32 %v1221, 1.0
  %v1225 = vadd.f32 %v1223, 1.0
  %v1226 = vrcp.pop %v1224
  %v1227 = vmul.f32 1.0, %v1226
  %v1228 = vrcp.pop %v1225
  %v1229 = vmul.f32 1.0, %v1228
  %v1230 = vadd.f32 %v1211, %v484
  %v1231 = vmul.f32 %v1227, %v1230
  %v1232 = vadd.f32 %v341, %v1231
  %v1233 = vtanh.pop %v1232
  %v1234 = vsub.f32 %v1132, %v1233
  %v1235 = vmul.f32 %v1229, %v1234
  %v1236 = vadd.f32 %v1233, %v1235
  %1237 = vst [vmem:[#allocation2 + $0x28] sm:$0xff] %v1236
  %v1238 = vpack.c.bf16 %v1236, %v1236
  %1239 = vmatprep.subr.bf16.mxu0 %v589
  %1240 = vmatpush1.bf16.msra.mxu0 %v588
  %1241 = vmatprep.subr.bf16.mxu0 %v586
  %1242 = vmatpush1.bf16.msra.mxu0 %v585
  %1243 = vmatprep.subr.bf16.mxu0 %v583
  %1244 = vmatpush1.bf16.msra.mxu0 %v582
  %1245 = vmatprep.subr.bf16.mxu0 %v580
  %1246 = vmatpush1.bf16.msra.mxu0 %v579
  %1247 = vmatprep.subr.bf16.mxu0 %v577
  %1248 = vmatpush1.bf16.msra.mxu0 %v576
  %1249 = vmatprep.subr.bf16.mxu0 %v574
  %1250 = vmatpush1.bf16.msra.mxu0 %v573
  %1251 = vmatprep.subr.bf16.mxu0 %v571
  %1252 = vmatpush1.bf16.msra.mxu0 %v570
  %1253 = vmatprep.subr.bf16.mxu0 %v568
  %1254 = vmatpush1.bf16.msra.mxu0 %v567
  %1255 = vmatprep.subr.bf16.mxu0 0
  %1256 = vmatpush2.bf16.msra.mxu0 0
  %1257 = vmatprep.subr.bf16.mxu0 0
  %1258 = vmatpush2.bf16.msra.mxu0 0
  %1259 = vmatprep.subr.bf16.mxu0 0
  %1260 = vmatpush2.bf16.msra.mxu0 0
  %1261 = vmatprep.subr.bf16.mxu0 0
  %1262 = vmatpush2.bf16.msra.mxu0 0
  %1263 = vmatprep.subr.bf16.mxu0 0
  %1264 = vmatpush2.bf16.msra.mxu0 0
  %1265 = vmatprep.subr.bf16.mxu0 0
  %1266 = vmatpush2.bf16.msra.mxu0 0
  %1267 = vmatprep.subr.bf16.mxu0 0
  %1268 = vmatpush2.bf16.msra.mxu0 0
  %1269 = vmatprep.subr.bf16.mxu0 0
  %1270 = vmatpush2.bf16.msra.mxu0 0
  %1271 = vmatprep.mubr.bf16.mxu0 0
  %1272 = vmatmul.mubr.bf16.gmra.mxu0 %v1238
  %v1273 = vpop.f32.mrf.mxu0
  %v1274 = vadd.f32 0.0, %v1273
  %v1275 = vpop.f32.mrf.mxu0
  %v1276 = vadd.f32 0.0, %v1275
  %v1277 = vpop.f32.mrf.mxu0
  %v1278 = vpop.f32.mrf.mxu0
  %1279 = vdwg.mxu0
  %1280 = vmatprep.subr.bf16.mxu0 0
  %1281 = vmatpush1.bf16.msra.mxu0 %v590
  %1282 = vmatprep.subr.bf16.mxu0 0
  %1283 = vmatpush1.bf16.msra.mxu0 %v587
  %1284 = vmatprep.subr.bf16.mxu0 0
  %1285 = vmatpush1.bf16.msra.mxu0 %v584
  %1286 = vmatprep.subr.bf16.mxu0 0
  %1287 = vmatpush1.bf16.msra.mxu0 %v581
  %1288 = vmatprep.subr.bf16.mxu0 0
  %1289 = vmatpush1.bf16.msra.mxu0 %v578
  %1290 = vmatprep.subr.bf16.mxu0 0
  %1291 = vmatpush1.bf16.msra.mxu0 %v575
  %1292 = vmatprep.subr.bf16.mxu0 0
  %1293 = vmatpush1.bf16.msra.mxu0 %v572
  %1294 = vmatprep.subr.bf16.mxu0 0
  %1295 = vmatpush1.bf16.msra.mxu0 %v569
  %1296 = vmatprep.subr.bf16.mxu0 0
  %1297 = vmatpush2.bf16.msra.mxu0 0
  %1298 = vmatprep.subr.bf16.mxu0 0
  %1299 = vmatpush2.bf16.msra.mxu0 0
  %1300 = vmatprep.subr.bf16.mxu0 0
  %1301 = vmatpush2.bf16.msra.mxu0 0
  %1302 = vmatprep.subr.bf16.mxu0 0
  %1303 = vmatpush2.bf16.msra.mxu0 0
  %1304 = vmatprep.subr.bf16.mxu0 0
  %1305 = vmatpush2.bf16.msra.mxu0 0
  %1306 = vmatprep.subr.bf16.mxu0 0
  %1307 = vmatpush2.bf16.msra.mxu0 0
  %1308 = vmatprep.subr.bf16.mxu0 0
  %1309 = vmatpush2.bf16.msra.mxu0 0
  %1310 = vmatprep.subr.bf16.mxu0 0
  %1311 = vmatpush2.bf16.msra.mxu0 0
  %1312 = vmatprep.mubr.bf16.mxu0 0
  %1313 = vmatmul.mubr.bf16.gmra.mxu0 %v1238
  %v1314 = vpop.f32.mrf.mxu0
  %v1315 = vadd.f32 0.0, %v1314
  %v1316 = vpop.f32.mrf.mxu0
  %v1317 = vpop.f32.mrf.mxu0
  %v1318 = vpop.f32.mrf.mxu0
  %1319 = vdwg.mxu0
  %v1320 = vadd.f32 %v239, %v1274
  %v1321 = vadd.f32 %v241, %v1276
  %v1322 = vxor.u32 %v1320, 2147483648
  %v1323 = vxor.u32 %v1321, 2147483648
  %v1324 = vmul.f32 %v1322, 1.442695
  %v1325 = vpow.pop %v1324
  %v1326 = vmul.f32 %v1323, 1.442695
  %v1327 = vpow.pop %v1326
  %v1328 = vadd.f32 %v1325, 1.0
  %v1329 = vadd.f32 %v1327, 1.0
  %v1330 = vrcp.pop %v1328
  %v1331 = vmul.f32 1.0, %v1330
  %v1332 = vrcp.pop %v1329
  %v1333 = vmul.f32 1.0, %v1332
  %v1334 = vadd.f32 %v1315, %v484
  %v1335 = vmul.f32 %v1331, %v1334
  %v1336 = vadd.f32 %v346, %v1335
  %v1337 = vtanh.pop %v1336
  %v1338 = vsub.f32 %v1236, %v1337
  %v1339 = vmul.f32 %v1333, %v1338
  %v1340 = vadd.f32 %v1337, %v1339
  %1341 = vst [vmem:[#allocation2 + $0x30] sm:$0xff] %v1340
  %v1342 = vpack.c.bf16 %v1340, %v1340
  %1343 = vmatprep.subr.bf16.mxu0 %v589
  %1344 = vmatpush1.bf16.msra.mxu0 %v588
  %1345 = vmatprep.subr.bf16.mxu0 %v586
  %1346 = vmatpush1.bf16.msra.mxu0 %v585
  %1347 = vmatprep.subr.bf16.mxu0 %v583
  %1348 = vmatpush1.bf16.msra.mxu0 %v582
  %1349 = vmatprep.subr.bf16.mxu0 %v580
  %1350 = vmatpush1.bf16.msra.mxu0 %v579
  %1351 = vmatprep.subr.bf16.mxu0 %v577
  %1352 = vmatpush1.bf16.msra.mxu0 %v576
  %1353 = vmatprep.subr.bf16.mxu0 %v574
  %1354 = vmatpush1.bf16.msra.mxu0 %v573
  %1355 = vmatprep.subr.bf16.mxu0 %v571
  %1356 = vmatpush1.bf16.msra.mxu0 %v570
  %1357 = vmatprep.subr.bf16.mxu0 %v568
  %1358 = vmatpush1.bf16.msra.mxu0 %v567
  %1359 = vmatprep.subr.bf16.mxu0 0
  %1360 = vmatpush2.bf16.msra.mxu0 0
  %1361 = vmatprep.subr.bf16.mxu0 0
  %1362 = vmatpush2.bf16.msra.mxu0 0
  %1363 = vmatprep.subr.bf16.mxu0 0
  %1364 = vmatpush2.bf16.msra.mxu0 0
  %1365 = vmatprep.subr.bf16.mxu0 0
  %1366 = vmatpush2.bf16.msra.mxu0 0
  %1367 = vmatprep.subr.bf16.mxu0 0
  %1368 = vmatpush2.bf16.msra.mxu0 0
  %1369 = vmatprep.subr.bf16.mxu0 0
  %1370 = vmatpush2.bf16.msra.mxu0 0
  %1371 = vmatprep.subr.bf16.mxu0 0
  %1372 = vmatpush2.bf16.msra.mxu0 0
  %1373 = vmatprep.subr.bf16.mxu0 0
  %1374 = vmatpush2.bf16.msra.mxu0 0
  %1375 = vmatprep.mubr.bf16.mxu0 0
  %1376 = vmatmul.mubr.bf16.gmra.mxu0 %v1342
  %v1377 = vpop.f32.mrf.mxu0
  %v1378 = vadd.f32 0.0, %v1377
  %v1379 = vpop.f32.mrf.mxu0
  %v1380 = vadd.f32 0.0, %v1379
  %v1381 = vpop.f32.mrf.mxu0
  %v1382 = vpop.f32.mrf.mxu0
  %1383 = vdwg.mxu0
  %1384 = vmatprep.subr.bf16.mxu0 0
  %1385 = vmatpush1.bf16.msra.mxu0 %v590
  %1386 = vmatprep.subr.bf16.mxu0 0
  %1387 = vmatpush1.bf16.msra.mxu0 %v587
  %1388 = vmatprep.subr.bf16.mxu0 0
  %1389 = vmatpush1.bf16.msra.mxu0 %v584
  %1390 = vmatprep.subr.bf16.mxu0 0
  %1391 = vmatpush1.bf16.msra.mxu0 %v581
  %1392 = vmatprep.subr.bf16.mxu0 0
  %1393 = vmatpush1.bf16.msra.mxu0 %v578
  %1394 = vmatprep.subr.bf16.mxu0 0
  %1395 = vmatpush1.bf16.msra.mxu0 %v575
  %1396 = vmatprep.subr.bf16.mxu0 0
  %1397 = vmatpush1.bf16.msra.mxu0 %v572
  %1398 = vmatprep.subr.bf16.mxu0 0
  %1399 = vmatpush1.bf16.msra.mxu0 %v569
  %1400 = vmatprep.subr.bf16.mxu0 0
  %1401 = vmatpush2.bf16.msra.mxu0 0
  %1402 = vmatprep.subr.bf16.mxu0 0
  %1403 = vmatpush2.bf16.msra.mxu0 0
  %1404 = vmatprep.subr.bf16.mxu0 0
  %1405 = vmatpush2.bf16.msra.mxu0 0
  %1406 = vmatprep.subr.bf16.mxu0 0
  %1407 = vmatpush2.bf16.msra.mxu0 0
  %1408 = vmatprep.subr.bf16.mxu0 0
  %1409 = vmatpush2.bf16.msra.mxu0 0
  %1410 = vmatprep.subr.bf16.mxu0 0
  %1411 = vmatpush2.bf16.msra.mxu0 0
  %1412 = vmatprep.subr.bf16.mxu0 0
  %1413 = vmatpush2.bf16.msra.mxu0 0
  %1414 = vmatprep.subr.bf16.mxu0 0
  %1415 = vmatpush2.bf16.msra.mxu0 0
  %1416 = vmatprep.mubr.bf16.mxu0 0
  %1417 = vmatmul.mubr.bf16.gmra.mxu0 %v1342
  %v1418 = vpop.f32.mrf.mxu0
  %v1419 = vadd.f32 0.0, %v1418
  %v1420 = vpop.f32.mrf.mxu0
  %v1421 = vpop.f32.mrf.mxu0
  %v1422 = vpop.f32.mrf.mxu0
  %1423 = vdwg.mxu0
  %v1424 = vadd.f32 %v245, %v1378
  %v1425 = vadd.f32 %v247, %v1380
  %v1426 = vxor.u32 %v1424, 2147483648
  %v1427 = vxor.u32 %v1425, 2147483648
  %v1428 = vmul.f32 %v1426, 1.442695
  %v1429 = vpow.pop %v1428
  %v1430 = vmul.f32 %v1427, 1.442695
  %v1431 = vpow.pop %v1430
  %v1432 = vadd.f32 %v1429, 1.0
  %v1433 = vadd.f32 %v1431, 1.0
  %v1434 = vrcp.pop %v1432
  %v1435 = vmul.f32 1.0, %v1434
  %v1436 = vrcp.pop %v1433
  %v1437 = vmul.f32 1.0, %v1436
  %v1438 = vadd.f32 %v1419, %v484
  %v1439 = vmul.f32 %v1435, %v1438
  %v1440 = vadd.f32 %v351, %v1439
  %v1441 = vtanh.pop %v1440
  %v1442 = vsub.f32 %v1340, %v1441
  %v1443 = vmul.f32 %v1437, %v1442
  %v1444 = vadd.f32 %v1441, %v1443
  %1445 = vst [vmem:[#allocation2 + $0x38] sm:$0xff] %v1444
  %v1446 = vld [vmem:[#allocation2] sm:$0xff]
  %v1447 = vld [vmem:[#allocation2 + $0x8] sm:$0xff]
  %v1448 = vld [vmem:[#allocation2 + $0x10] sm:$0xff]
  %v1449 = vld [vmem:[#allocation2 + $0x18] sm:$0xff]
  %v1450 = vld [vmem:[#allocation2 + $0x20] sm:$0xff]
  %v1451 = vld [vmem:[#allocation2 + $0x28] sm:$0xff]
  %v1452 = vld [vmem:[#allocation2 + $0x30] sm:$0xff]
  %v1453 = vld [vmem:[#allocation2 + $0x38] sm:$0xff]
  %v1454 = vpack.c.bf16 %v1447, %v1446
  %v1455 = vpack.c.bf16 %v1449, %v1448
  %v1456 = vpack.c.bf16 %v1451, %v1450
  %v1457 = vpack.c.bf16 %v1453, %v1452
  %v1458 = vld [vmem:[%s6] sm:$0xf]
  %v1459 = vld [vmem:[%s6 + $0x4] sm:$0xf]
  %v1460 = vld [vmem:[%s6 + $0x8] sm:$0xf]
  %v1461 = vld [vmem:[%s6 + $0xc] sm:$0xf]
  %v1462 = vld [vmem:[%s6 + $0x10] sm:$0xf]
  %v1463 = vld [vmem:[%s6 + $0x14] sm:$0xf]
  %v1464 = vld [vmem:[%s6 + $0x18] sm:$0xf]
  %v1465 = vld [vmem:[%s6 + $0x1c] sm:$0xf]
  %v1466 = vld [vmem:[%s6 + $0x20] sm:$0xf]
  %v1467 = vld [vmem:[%s6 + $0x24] sm:$0xf]
  %v1468 = vld [vmem:[%s6 + $0x28] sm:$0xf]
  %v1469 = vld [vmem:[%s6 + $0x2c] sm:$0xf]
  %v1470 = vld [vmem:[%s6 + $0x30] sm:$0xf]
  %v1471 = vld [vmem:[%s6 + $0x34] sm:$0xf]
  %v1472 = vld [vmem:[%s6 + $0x38] sm:$0xf]
  %v1473 = vld [vmem:[%s6 + $0x3c] sm:$0xf]
  %v1474 = vld [vmem:[%s7] sm:$0x1]
  %v1476 = vlaneseq
  %v1477 = vshrl.u32 %v1476, 7
  %v1478 = vsub.s32 0, %v1477
  %v1479 = vrot.slane %v1474, %v1478
  %v1497 = vunpack.c.l.b16 %v1458
  %v1498 = vunpack.c.l.b16 %v1459
  %v1499 = vunpack.c.l.b16 %v1460
  %v1500 = vunpack.c.l.b16 %v1461
  %v1501 = vunpack.c.l.b16 %v1462
  %v1502 = vunpack.c.l.b16 %v1463
  %v1503 = vunpack.c.l.b16 %v1464
  %v1504 = vunpack.c.l.b16 %v1465
  %v1505 = vunpack.c.l.b16 %v1466
  %v1506 = vunpack.c.l.b16 %v1467
  %v1507 = vunpack.c.l.b16 %v1468
  %v1508 = vunpack.c.l.b16 %v1469
  %v1509 = vunpack.c.l.b16 %v1470
  %v1510 = vunpack.c.l.b16 %v1471
  %v1511 = vunpack.c.l.b16 %v1472
  %v1512 = vunpack.c.l.b16 %v1473
  %v1513 = vpack.c.b16 %v1498, %v1497
  %v1514 = vpack.c.b16 %v1500, %v1499
  %v1515 = vpack.c.b16 %v1502, %v1501
  %v1516 = vpack.c.b16 %v1504, %v1503
  %v1517 = vpack.c.b16 %v1506, %v1505
  %v1518 = vpack.c.b16 %v1508, %v1507
  %v1519 = vpack.c.b16 %v1510, %v1509
  %v1520 = vpack.c.b16 %v1512, %v1511
  %1529 = vmatprep.subr.bf16.mxu0 0
  %1530 = vmatpush1.bf16.msra.mxu0 %v1520
  %1531 = vmatprep.subr.bf16.mxu0 0
  %1532 = vmatpush1.bf16.msra.mxu0 %v1519
  %1533 = vmatprep.subr.bf16.mxu0 0
  %1534 = vmatpush1.bf16.msra.mxu0 %v1518
  %1535 = vmatprep.subr.bf16.mxu0 0
  %1536 = vmatpush1.bf16.msra.mxu0 %v1517
  %1537 = vmatprep.subr.bf16.mxu0 0
  %1538 = vmatpush1.bf16.msra.mxu0 %v1516
  %1539 = vmatprep.subr.bf16.mxu0 0
  %1540 = vmatpush1.bf16.msra.mxu0 %v1515
  %1541 = vmatprep.subr.bf16.mxu0 0
  %1542 = vmatpush1.bf16.msra.mxu0 %v1514
  %1543 = vmatprep.subr.bf16.mxu0 0
  %1544 = vmatpush1.bf16.msra.mxu0 %v1513
  %1545 = vmatprep.subr.bf16.mxu0 0
  %1546 = vmatpush2.bf16.msra.mxu0 0
  %1547 = vmatprep.subr.bf16.mxu0 0
  %1548 = vmatpush2.bf16.msra.mxu0 0
  %1549 = vmatprep.subr.bf16.mxu0 0
  %1550 = vmatpush2.bf16.msra.mxu0 0
  %1551 = vmatprep.subr.bf16.mxu0 0
  %1552 = vmatpush2.bf16.msra.mxu0 0
  %1553 = vmatprep.subr.bf16.mxu0 0
  %1554 = vmatpush2.bf16.msra.mxu0 0
  %1555 = vmatprep.subr.bf16.mxu0 0
  %1556 = vmatpush2.bf16.msra.mxu0 0
  %1557 = vmatprep.subr.bf16.mxu0 0
  %1558 = vmatpush2.bf16.msra.mxu0 0
  %1559 = vmatprep.subr.bf16.mxu0 0
  %1560 = vmatpush2.bf16.msra.mxu0 0
  %1561 = vmatprep.mubr.bf16.mxu0 0
  %1562 = vmatmul.mubr.bf16.gmra.mxu0 %v1454
  %v1563 = vpop.f32.mrf.mxu0
  %v1564 = vadd.f32 %v1479, %v1563
  %v1565 = vpop.f32.mrf.mxu0
  %v1566 = vpop.f32.mrf.mxu0
  %v1567 = vadd.f32 %v1479, %v1566
  %v1568 = vpop.f32.mrf.mxu0
  %1569 = vmatprep.mubr.bf16.mxu0 0
  %1570 = vmatmul.mubr.bf16.gmra.mxu0 %v1455
  %v1571 = vpop.f32.mrf.mxu0
  %v1572 = vadd.f32 %v1479, %v1571
  %v1573 = vpop.f32.mrf.mxu0
  %v1574 = vpop.f32.mrf.mxu0
  %v1575 = vadd.f32 %v1479, %v1574
  %v1576 = vpop.f32.mrf.mxu0
  %1577 = vmatprep.mubr.bf16.mxu0 0
  %1578 = vmatmul.mubr.bf16.gmra.mxu0 %v1456
  %v1579 = vpop.f32.mrf.mxu0
  %v1580 = vadd.f32 %v1479, %v1579
  %v1581 = vpop.f32.mrf.mxu0
  %v1582 = vpop.f32.mrf.mxu0
  %v1583 = vadd.f32 %v1479, %v1582
  %v1584 = vpop.f32.mrf.mxu0
  %1585 = vmatprep.mubr.bf16.mxu0 0
  %1586 = vmatmul.mubr.bf16.gmra.mxu0 %v1457
  %v1587 = vpop.f32.mrf.mxu0
  %v1588 = vadd.f32 %v1479, %v1587
  %v1589 = vpop.f32.mrf.mxu0
  %v1590 = vpop.f32.mrf.mxu0
  %v1591 = vadd.f32 %v1479, %v1590
  %v1592 = vpop.f32.mrf.mxu0
  %1593 = vdwg.mxu0
  %1594 = vst [vmem:[%s8] sm:$0xff] %v1564
  %1595 = vst [vmem:[%s8 + $0x8] sm:$0xff] %v1567
  %1596 = vst [vmem:[%s8 + $0x10] sm:$0xff] %v1572
  %1597 = vst [vmem:[%s8 + $0x18] sm:$0xff] %v1575
  %1598 = vst [vmem:[%s8 + $0x20] sm:$0xff] %v1580
  %1599 = vst [vmem:[%s8 + $0x28] sm:$0xff] %v1583
  %1600 = vst [vmem:[%s8 + $0x30] sm:$0xff] %v1588
  %1601 = vst [vmem:[%s8 + $0x38] sm:$0xff] %v1591
  // Predicated region
  $region34: #{surname_generation_forward.1} parent=0 // pred_check
    _
  $region35: #{surname_generation_forward.1} parent=0 // pred_check_branch
    %1603 = sbr.rel (0) target = $region37
  $region36: #{surname_generation_forward.1} parent=0 // pred_region
    _
  $region37: #{surname_generation_forward.1} parent=0 // pred_fallthru
    _
  // Predicated region
  $region38: #{surname_generation_forward.1} parent=0 // pred_check
    _
  $region39: #{surname_generation_forward.1} parent=0 // pred_check_branch
    %1605 = sbr.rel (0) target = $region41
  $region40: #{surname_generation_forward.1} parent=0 // pred_region
    _
  $region41: #{surname_generation_forward.1} parent=0 // pred_fallthru
    _

</llo_original>
